<compile_context>
chip_gen: v7x
topology: tpu7x:2x2x1
jax: 0.10.0
libtpu: 0.0.40
codegen_flags: <defaults>
</compile_context>

<pallas_src>
import jax
import jax.numpy as jnp
from jax import lax
from jax.experimental import pallas as pl
from jax.experimental.pallas import tpu as pltpu

HIDDEN_SIZE = 80   # true model hidden size (matches the PyTorch module)
H_PAD = 128        # lane-padded hidden size used inside the kernel


def _episodic_memory_kernel(facts_ref, qm_ref, w_ref, w_uru_ref, b_ref,
                            out_ref, wrf_s, wf_s, g_s):
    """facts_ref: (S*B, HP) seq-major flat (row = s*B + b), zero-padded lanes.
    qm_ref: (2B, HP): rows [0:B) questions, [B:2B) prevM.
    w_ref: (10*HP, HP) weight slab: [z1_fq, z1_fm, z1_dq, z1_dm, z2_bcast,
                                     Wr, W, nm_m, nm_c, nm_q]  (all (in, out)).
    w_uru_ref: (HP, 2*HP) column-fused [Ur | U] recurrence RHS.
    b_ref: (8, HP) bias slab: rows [b_z1, b_z2, b_wr+b_ur, b_w, b_u, b_nm, 0, 0].
    out_ref: (B, HP) next memory (lane-dense; sliced back to 80 on the host)."""
    f32 = jnp.float32
    SB, HP = facts_ref.shape
    B = qm_ref.shape[0] // 2
    S = SB // B

    facts = facts_ref[...]                       # (SB, HP)
    facts3 = facts.reshape(S, B, HP)
    q_b = qm_ref[0:B, :]                         # (B, HP)
    m_b = qm_ref[B:2 * B, :]
    bias = b_ref[...]                            # (8, HP) -> one vreg

    # ---- attention gates G: fully vectorized, hoisted off the serial chain ----
    # K-stacked interaction [f*q | f*m | |f-q| | |f-m|] -> one accumulating matmul.
    z_in = jnp.concatenate(
        [(facts3 * q_b).reshape(SB, HP),
         (facts3 * m_b).reshape(SB, HP),
         jnp.abs(facts3 - q_b).reshape(SB, HP),
         jnp.abs(facts3 - m_b).reshape(SB, HP)], axis=1)           # (SB, 4*HP)
    zh = jnp.dot(z_in, w_ref[0:4 * HP, :], preferred_element_type=f32) + bias[0:1, :]
    gt = jnp.tanh(zh)                                              # (SB, HP); padded lanes = 0
    # w_z2 is broadcast across all 128 output columns -> lane-constant scores,
    # so the softmax and the gates are dense with no cross-lane ops.
    scores = (jnp.dot(gt, w_ref[4 * HP:5 * HP, :], preferred_element_type=f32)
              + bias[1:2, :])                                      # (SB, HP) lane-constant
    s3 = scores.reshape(S, B, HP)
    s_max = jnp.max(s3, axis=0, keepdims=True)                     # per-batch max (no 0/0)
    e = jnp.exp(s3 - s_max)
    denom = jnp.sum(e, axis=0, keepdims=True)
    g_s[...] = (e * pl.reciprocal(denom, approx=True)).reshape(SB, HP)

    # ---- hoisted fact projections (no sequential dependency) ----
    wrf_s[...] = (jnp.dot(facts, w_ref[5 * HP:6 * HP, :], preferred_element_type=f32)
                  + bias[2:3, :])                                  # Wr f + (b_wr + b_ur)
    wf_s[...] = (jnp.dot(facts, w_ref[6 * HP:7 * HP, :], preferred_element_type=f32)
                 + bias[3:4, :])                                   # W f + b_w

    w_uru = w_uru_ref[...]                                         # (HP, 2HP) fused [Ur|U]
    b_u = bias[4:5, :]

    # ---- attention-GRU recurrence: only the truly sequential work stays here ----
    def step(sid, c):
        row = pl.multiple_of(sid * B, B)          # B multiple of 8 -> sublane-aligned
        wrf = wrf_s[pl.ds(row, B), :]
        wf = wf_s[pl.ds(row, B), :]
        g = g_s[pl.ds(row, B), :]
        uu = jnp.dot(c, w_uru, preferred_element_type=f32)         # one (B,HP)@(HP,2HP)
        r = jax.nn.sigmoid(wrf + uu[:, 0:HP])
        h_tilda = jnp.tanh(wf + r * (uu[:, HP:2 * HP] + b_u))
        return g * h_tilda + (1.0 - g) * c

    c_final = lax.fori_loop(0, S, step, jnp.zeros((B, HP), f32), unroll=True)

    # ---- next memory: relu(W [prevM; C; q] + b) ----
    nm = (jnp.dot(m_b, w_ref[7 * HP:8 * HP, :], preferred_element_type=f32)
          + jnp.dot(c_final, w_ref[8 * HP:9 * HP, :], preferred_element_type=f32)
          + jnp.dot(q_b, w_ref[9 * HP:10 * HP, :], preferred_element_type=f32)
          + bias[5:6, :])
    out_ref[...] = jnp.maximum(nm, 0.0)


def episodic_memory_forward(facts, questions, prevM, params):
    """facts: (B, S, H), questions: (B, 1, H), prevM: (B, 1, H) -> next_mem (B, 1, H)."""
    B0, S, H = facts.shape
    HP = H_PAD
    Bp = ((B0 + 7) // 8) * 8            # sublane-aligned batch
    SB = S * Bp
    f32 = jnp.float32

    facts = facts.astype(f32)
    q_b = questions.reshape(B0, H).astype(f32)
    m_b = prevM.reshape(B0, H).astype(f32)

    def pad_bh(x):                       # (B0, H) -> (Bp, HP), zero padded
        return jnp.zeros((Bp, HP), f32).at[:B0, :H].set(x)

    # seq-major flatten: row s*Bp + b == facts[b, s, :]
    facts_f = (jnp.zeros((S, Bp, HP), f32)
               .at[:, :B0, :H].set(jnp.transpose(facts, (1, 0, 2)))
               .reshape(SB, HP))
    qm = jnp.concatenate([pad_bh(q_b), pad_bh(m_b)], axis=0)       # (2*Bp, HP)

    # Padded rows/cols of every weight/bias are exactly zero -> padded lanes of
    # C stay 0 through the recurrence (required invariant for the 80->128 pad).
    pw = lambda w: jnp.zeros((HP, HP), f32).at[:w.shape[0], :w.shape[1]].set(w)
    pb = lambda b: jnp.zeros((1, HP), f32).at[:, :b.shape[1]].set(b)
    wz2_b = jnp.zeros((HP, HP), f32).at[:H, :].set(jnp.broadcast_to(params["w_z2"], (H, HP)))
    bz2_b = jnp.broadcast_to(params["b_z2"], (1, HP)).astype(f32)

    # TODO(synk): in a full DMN model these slabs are constants -- build once
    # outside the pass loop (or keep VMEM-resident across calls) instead of per call.
    w_slab = jnp.concatenate(
        [pw(params["w_z1_fq"]), pw(params["w_z1_fm"]),
         pw(params["w_z1_dq"]), pw(params["w_z1_dm"]),
         wz2_b,
         pw(params["w_wr"]), pw(params["w_w"]),
         pw(params["w_nm_m"]), pw(params["w_nm_c"]), pw(params["w_nm_q"])],
        axis=0)                                                     # (10*HP, HP)
    w_uru = jnp.concatenate([pw(params["w_ur"]), pw(params["w_u"])], axis=1)   # (HP, 2HP)
    b_slab = jnp.concatenate(
        [pb(params["b_z1"]), bz2_b,
         pb(params["b_wr"] + params["b_ur"]),      # fused r-gate bias (host-side fold)
         pb(params["b_w"]), pb(params["b_u"]), pb(params["b_nm"]),
         jnp.zeros((2, HP), f32)], axis=0)                          # (8, HP)

    kernel_args = (facts_f, qm, w_slab, w_uru, b_slab)

    flops = 2 * (SB * 4 * HP * HP        # z1 K-stacked matmul
                 + SB * HP * HP          # z2 lane-broadcast matmul
                 + 2 * SB * HP * HP      # hoisted Wr f, W f
                 + S * Bp * HP * 2 * HP  # fused [Ur|U] recurrence
                 + 3 * Bp * HP * HP)     # next_mem
    transcendentals = 3 * SB * HP + 2 * S * Bp * HP
    bytes_accessed = 4 * (sum(int(a.size) for a in kernel_args) + Bp * HP)

    next_mem = pl.pallas_call(
        _episodic_memory_kernel,
        out_shape=jax.ShapeDtypeStruct((Bp, HP), f32),
        in_specs=[pl.BlockSpec(memory_space=pltpu.MemorySpace.VMEM)] * len(kernel_args),
        out_specs=pl.BlockSpec(memory_space=pltpu.MemorySpace.VMEM),
        scratch_shapes=[
            pltpu.VMEM((SB, HP), f32),   # hoisted Wr(fact) + fused bias
            pltpu.VMEM((SB, HP), f32),   # hoisted W(fact) + bias
            pltpu.VMEM((SB, HP), f32),   # dense attention gates
        ],
        compiler_params=pltpu.CompilerParams(vmem_limit_bytes=4 * 1024 * 1024),
        cost_estimate=pl.CostEstimate(
            flops=int(flops),
            transcendentals=int(transcendentals),
            bytes_accessed=int(bytes_accessed),
        ),
    )(*kernel_args)

    return next_mem[:B0, :H][:, None, :]


def init_params(key):
    """Deterministic synthetic params, uniform(-1/sqrt(H), 1/sqrt(H)).

    Weights are stored transposed relative to torch ((in, out)); the 4H / 3H
    concatenated Linears (z1, next_mem) are stored as per-block (H, H) matrices.
    """
    H = HIDDEN_SIZE
    k = 1.0 / jnp.sqrt(jnp.float32(H))
    names_shapes = [
        ("w_z1_fq", (H, H)), ("w_z1_fm", (H, H)), ("w_z1_dq", (H, H)), ("w_z1_dm", (H, H)),
        ("b_z1", (1, H)),
        ("w_z2", (H, 1)), ("b_z2", (1, 1)),
        ("w_wr", (H, H)), ("w_ur", (H, H)), ("w_w", (H, H)), ("w_u", (H, H)),
        ("b_wr", (1, H)), ("b_ur", (1, H)), ("b_w", (1, H)), ("b_u", (1, H)),
        ("w_nm_m", (H, H)), ("w_nm_c", (H, H)), ("w_nm_q", (H, H)),
        ("b_nm", (1, H)),
    ]
    keys = jax.random.split(key, len(names_shapes))
    return {name: jax.random.uniform(kk, shape, jnp.float32, -k, k)
            for kk, (name, shape) in zip(keys, names_shapes)}


def reference_forward(facts, questions, prevM, params):
    """Pure-JAX mirror of the PyTorch EpisodicMemory.forward (for verification)."""
    B, S, H = facts.shape
    q = jnp.broadcast_to(questions, (B, S, H))
    m = jnp.broadcast_to(prevM, (B, S, H))

    # make_interaction
    z = jnp.concatenate(
        [facts * q, facts * m, jnp.abs(facts - q), jnp.abs(facts - m)], axis=2)
    z = z.reshape(-1, 4 * H)
    w_z1 = jnp.concatenate(
        [params["w_z1_fq"], params["w_z1_fm"], params["w_z1_dq"], params["w_z1_dm"]], axis=0)
    g_hidden = jnp.tanh(z @ w_z1 + params["b_z1"])
    scores = g_hidden @ params["w_z2"] + params["b_z2"]
    G = jax.nn.softmax(scores.reshape(B, S), axis=1)

    # AttentionGRU
    C = jnp.zeros((B, H), jnp.float32)
    for sid in range(S):
        fact = facts[:, sid, :]
        g = G[:, sid][:, None]
        r = jax.nn.sigmoid(fact @ params["w_wr"] + params["b_wr"]
                           + C @ params["w_ur"] + params["b_ur"])
        h_tilda = jnp.tanh(fact @ params["w_w"] + params["b_w"]
                           + r * (C @ params["w_u"] + params["b_u"]))
        C = g * h_tilda + (1.0 - g) * C

    # next memory
    concat = jnp.concatenate([prevM.reshape(B, H), C, questions.reshape(B, H)], axis=1)
    w_nm = jnp.concatenate([params["w_nm_m"], params["w_nm_c"], params["w_nm_q"]], axis=0)
    next_mem = jax.nn.relu(concat @ w_nm + params["b_nm"])
    return next_mem[:, None, :]


if __name__ == "__main__":
    key = jax.random.PRNGKey(0)
    k_p, k_f, k_q, k_m = jax.random.split(key, 4)

    params = init_params(k_p)

    B, S, H = 8, 8, HIDDEN_SIZE      # batch, #sentences, hidden (= embedding)
    facts = jax.random.normal(k_f, (B, S, H), jnp.float32)
    questions = jax.random.normal(k_q, (B, 1, H), jnp.float32)
    prevM = jax.random.normal(k_m, (B, 1, H), jnp.float32)

    next_mem = episodic_memory_forward(facts, questions, prevM, params)
    next_mem = jax.block_until_ready(next_mem)

    ref = reference_forward(facts, questions, prevM, params)
    assert next_mem.shape == (B, 1, HIDDEN_SIZE)
    err = float(jnp.max(jnp.abs(next_mem - ref)))
    assert jnp.allclose(next_mem, ref, atol=2e-3, rtol=2e-3), f"max abs err = {err}"

    print("KERNEL_OK")
</pallas_src>

<mosaic_0001>
module attributes {stable_mosaic.version = 11 : i64} {
  func.func @_episodic_memory_kernel(%arg0: memref<64x128xf32, #tpu.memory_space<vmem>>, %arg1: memref<16x128xf32, #tpu.memory_space<vmem>>, %arg2: memref<1280x128xf32, #tpu.memory_space<vmem>>, %arg3: memref<128x256xf32, #tpu.memory_space<vmem>>, %arg4: memref<8x128xf32, #tpu.memory_space<vmem>>, %arg5: memref<8x128xf32, #tpu.memory_space<vmem>>, %arg6: memref<64x128xf32, #tpu.memory_space<vmem>>, %arg7: memref<64x128xf32, #tpu.memory_space<vmem>>, %arg8: memref<64x128xf32, #tpu.memory_space<vmem>>) attributes {dimension_semantics = [], scalar_prefetch = 0 : i64, scratch_operands = 3 : i64, tpu.core_type = #tpu.core_type<tc>} {
    %c0 = arith.constant 0 : index
    %c0_0 = arith.constant 0 : index
    %0 = vector.load %arg0[%c0, %c0_0] : memref<64x128xf32, #tpu.memory_space<vmem>>, vector<64x128xf32>
    %1 = vector.shape_cast %0 : vector<64x128xf32> to vector<8x8x128xf32>
    %c0_1 = arith.constant 0 : index
    %c0_2 = arith.constant 0 : index
    %2 = vector.load %arg1[%c0_1, %c0_2] : memref<16x128xf32, #tpu.memory_space<vmem>>, vector<8x128xf32>
    %c8 = arith.constant 8 : index
    %c0_3 = arith.constant 0 : index
    %3 = vector.load %arg1[%c8, %c0_3] : memref<16x128xf32, #tpu.memory_space<vmem>>, vector<8x128xf32>
    %c0_4 = arith.constant 0 : index
    %c0_5 = arith.constant 0 : index
    %4 = vector.load %arg4[%c0_4, %c0_5] : memref<8x128xf32, #tpu.memory_space<vmem>>, vector<8x128xf32>
    %5 = vector.shape_cast %2 : vector<8x128xf32> to vector<1x8x128xf32>
    %6 = vector.broadcast %5 : vector<1x8x128xf32> to vector<8x8x128xf32>
    %7 = arith.mulf %1, %6 : vector<8x8x128xf32>
    %8 = vector.shape_cast %7 : vector<8x8x128xf32> to vector<64x128xf32>
    %9 = vector.shape_cast %3 : vector<8x128xf32> to vector<1x8x128xf32>
    %10 = vector.broadcast %9 : vector<1x8x128xf32> to vector<8x8x128xf32>
    %11 = arith.mulf %1, %10 : vector<8x8x128xf32>
    %12 = vector.shape_cast %11 : vector<8x8x128xf32> to vector<64x128xf32>
    %13 = vector.shape_cast %2 : vector<8x128xf32> to vector<1x8x128xf32>
    %14 = vector.broadcast %13 : vector<1x8x128xf32> to vector<8x8x128xf32>
    %15 = arith.subf %1, %14 : vector<8x8x128xf32>
    %16 = math.absf %15 : vector<8x8x128xf32>
    %17 = vector.shape_cast %16 : vector<8x8x128xf32> to vector<64x128xf32>
    %18 = vector.shape_cast %3 : vector<8x128xf32> to vector<1x8x128xf32>
    %19 = vector.broadcast %18 : vector<1x8x128xf32> to vector<8x8x128xf32>
    %20 = arith.subf %1, %19 : vector<8x8x128xf32>
    %21 = math.absf %20 : vector<8x8x128xf32>
    %22 = vector.shape_cast %21 : vector<8x8x128xf32> to vector<64x128xf32>
    %23 = tpu.concatenate %8, %12, %17, %22 in 1 : vector<64x128xf32>, vector<64x128xf32>, vector<64x128xf32>, vector<64x128xf32> -> vector<64x512xf32>
    %c0_6 = arith.constant 0 : index
    %c0_7 = arith.constant 0 : index
    %24 = vector.load %arg2[%c0_6, %c0_7] : memref<1280x128xf32, #tpu.memory_space<vmem>>, vector<512x128xf32>
    %cst = arith.constant dense<0.000000e+00> : vector<64x128xf32>
    %25 = tpu.matmul %23, %24, %cst {dimension_numbers = #tpu.dot_dimension_numbers<[1], [0], [0], [1], [0, 0, 1, 1], [], []>} : vector<64x512xf32>, vector<512x128xf32>, vector<64x128xf32> -> vector<64x128xf32>
    %26 = vector.extract_strided_slice %4 {offsets = [0, 0], sizes = [1, 128], strides = [1, 1]} : vector<8x128xf32> to vector<1x128xf32>
    %27 = vector.broadcast %26 : vector<1x128xf32> to vector<64x128xf32>
    %28 = arith.addf %25, %27 : vector<64x128xf32>
    %29 = math.tanh %28 : vector<64x128xf32>
    %c512 = arith.constant 512 : index
    %c0_8 = arith.constant 0 : index
    %30 = vector.load %arg2[%c512, %c0_8] : memref<1280x128xf32, #tpu.memory_space<vmem>>, vector<128x128xf32>
    %cst_9 = arith.constant dense<0.000000e+00> : vector<64x128xf32>
    %31 = tpu.matmul %29, %30, %cst_9 {dimension_numbers = #tpu.dot_dimension_numbers<[1], [0], [0], [1], [0, 0, 1, 1], [], []>} : vector<64x128xf32>, vector<128x128xf32>, vector<64x128xf32> -> vector<64x128xf32>
    %32 = vector.extract_strided_slice %4 {offsets = [1, 0], sizes = [1, 128], strides = [1, 1]} : vector<8x128xf32> to vector<1x128xf32>
    %33 = vector.broadcast %32 : vector<1x128xf32> to vector<64x128xf32>
    %34 = arith.addf %31, %33 : vector<64x128xf32>
    %35 = vector.shape_cast %34 : vector<64x128xf32> to vector<8x8x128xf32>
    %cst_10 = arith.constant dense<0xFF800000> : vector<8x128xf32>
    %36 = vector.multi_reduction <maximumf>, %35, %cst_10 [0] : vector<8x8x128xf32> to vector<8x128xf32>
    %37 = vector.shape_cast %36 : vector<8x128xf32> to vector<1x8x128xf32>
    %38 = vector.broadcast %37 : vector<1x8x128xf32> to vector<8x8x128xf32>
    %39 = arith.subf %35, %38 : vector<8x8x128xf32>
    %40 = math.exp %39 : vector<8x8x128xf32>
    %cst_11 = arith.constant dense<0.000000e+00> : vector<8x128xf32>
    %41 = vector.multi_reduction <add>, %40, %cst_11 [0] : vector<8x8x128xf32> to vector<8x128xf32>
    %42 = vector.shape_cast %41 : vector<8x128xf32> to vector<1x8x128xf32>
    %43 = tpu.reciprocal %42 {approx = true} : vector<1x8x128xf32> -> vector<1x8x128xf32>
    %44 = vector.broadcast %43 : vector<1x8x128xf32> to vector<8x8x128xf32>
    %45 = arith.mulf %40, %44 : vector<8x8x128xf32>
    %46 = vector.shape_cast %45 : vector<8x8x128xf32> to vector<64x128xf32>
    %c0_12 = arith.constant 0 : index
    %c0_13 = arith.constant 0 : index
    %47 = vector.load %arg8[%c0_12, %c0_13] : memref<64x128xf32, #tpu.memory_space<vmem>>, vector<64x128xf32>
    tpu.vector_store %arg8[%c0_12, %c0_13], %46 {strides = array<i32>} : memref<64x128xf32, #tpu.memory_space<vmem>>, vector<64x128xf32>,
    %c640 = arith.constant 640 : index
    %c0_14 = arith.constant 0 : index
    %48 = vector.load %arg2[%c640, %c0_14] : memref<1280x128xf32, #tpu.memory_space<vmem>>, vector<128x128xf32>
    %cst_15 = arith.constant dense<0.000000e+00> : vector<64x128xf32>
    %49 = tpu.matmul %0, %48, %cst_15 {dimension_numbers = #tpu.dot_dimension_numbers<[1], [0], [0], [1], [0, 0, 1, 1], [], []>} : vector<64x128xf32>, vector<128x128xf32>, vector<64x128xf32> -> vector<64x128xf32>
    %50 = vector.extract_strided_slice %4 {offsets = [2, 0], sizes = [1, 128], strides = [1, 1]} : vector<8x128xf32> to vector<1x128xf32>
    %51 = vector.broadcast %50 : vector<1x128xf32> to vector<64x128xf32>
    %52 = arith.addf %49, %51 : vector<64x128xf32>
    %c0_16 = arith.constant 0 : index
    %c0_17 = arith.constant 0 : index
    %53 = vector.load %arg6[%c0_16, %c0_17] : memref<64x128xf32, #tpu.memory_space<vmem>>, vector<64x128xf32>
    tpu.vector_store %arg6[%c0_16, %c0_17], %52 {strides = array<i32>} : memref<64x128xf32, #tpu.memory_space<vmem>>, vector<64x128xf32>,
    %c768 = arith.constant 768 : index
    %c0_18 = arith.constant 0 : index
    %54 = vector.load %arg2[%c768, %c0_18] : memref<1280x128xf32, #tpu.memory_space<vmem>>, vector<128x128xf32>
    %cst_19 = arith.constant dense<0.000000e+00> : vector<64x128xf32>
    %55 = tpu.matmul %0, %54, %cst_19 {dimension_numbers = #tpu.dot_dimension_numbers<[1], [0], [0], [1], [0, 0, 1, 1], [], []>} : vector<64x128xf32>, vector<128x128xf32>, vector<64x128xf32> -> vector<64x128xf32>
    %56 = vector.extract_strided_slice %4 {offsets = [3, 0], sizes = [1, 128], strides = [1, 1]} : vector<8x128xf32> to vector<1x128xf32>
    %57 = vector.broadcast %56 : vector<1x128xf32> to vector<64x128xf32>
    %58 = arith.addf %55, %57 : vector<64x128xf32>
    %c0_20 = arith.constant 0 : index
    %c0_21 = arith.constant 0 : index
    %59 = vector.load %arg7[%c0_20, %c0_21] : memref<64x128xf32, #tpu.memory_space<vmem>>, vector<64x128xf32>
    tpu.vector_store %arg7[%c0_20, %c0_21], %58 {strides = array<i32>} : memref<64x128xf32, #tpu.memory_space<vmem>>, vector<64x128xf32>,
    %c0_22 = arith.constant 0 : index
    %c0_23 = arith.constant 0 : index
    %60 = vector.load %arg3[%c0_22, %c0_23] : memref<128x256xf32, #tpu.memory_space<vmem>>, vector<128x256xf32>
    %61 = vector.extract_strided_slice %4 {offsets = [4, 0], sizes = [1, 128], strides = [1, 1]} : vector<8x128xf32> to vector<1x128xf32>
    %cst_24 = arith.constant 0.000000e+00 : f32
    %62 = vector.broadcast %cst_24 : f32 to vector<8x128xf32>
    %c0_i32 = arith.constant 0 : i32
    %c8_i32 = arith.constant 8 : i32
    %63 = arith.muli %c0_i32, %c8_i32 : i32
    %64 = tpu.assume_multiple %63, 8 : i32
    %65 = arith.index_cast %64 : i32 to index
    %c0_25 = arith.constant 0 : index
    %66 = vector.load %arg6[%65, %c0_25] : memref<64x128xf32, #tpu.memory_space<vmem>>, vector<8x128xf32>
    %67 = arith.index_cast %64 : i32 to index
    %c0_26 = arith.constant 0 : index
    %68 = vector.load %arg7[%67, %c0_26] : memref<64x128xf32, #tpu.memory_space<vmem>>, vector<8x128xf32>
    %69 = arith.index_cast %64 : i32 to index
    %c0_27 = arith.constant 0 : index
    %70 = vector.load %arg8[%69, %c0_27] : memref<64x128xf32, #tpu.memory_space<vmem>>, vector<8x128xf32>
    %cst_28 = arith.constant dense<0.000000e+00> : vector<8x256xf32>
    %71 = tpu.matmul %62, %60, %cst_28 {dimension_numbers = #tpu.dot_dimension_numbers<[1], [0], [0], [1], [0, 0, 1, 1], [], []>} : vector<8x128xf32>, vector<128x256xf32>, vector<8x256xf32> -> vector<8x256xf32>
    %72 = vector.extract_strided_slice %71 {offsets = [0, 0], sizes = [8, 128], strides = [1, 1]} : vector<8x256xf32> to vector<8x128xf32>
    %73 = arith.addf %66, %72 : vector<8x128xf32>
    %74 = arith.negf %73 : vector<8x128xf32>
    %75 = math.exp %74 : vector<8x128xf32>
    %cst_29 = arith.constant 1.000000e+00 : f32
    %76 = vector.broadcast %cst_29 : f32 to vector<8x128xf32>
    %77 = arith.addf %76, %75 : vector<8x128xf32>
    %78 = arith.divf %76, %77 : vector<8x128xf32>
    %79 = vector.extract_strided_slice %71 {offsets = [0, 128], sizes = [8, 128], strides = [1, 1]} : vector<8x256xf32> to vector<8x128xf32>
    %80 = vector.broadcast %61 : vector<1x128xf32> to vector<8x128xf32>
    %81 = arith.addf %79, %80 : vector<8x128xf32>
    %82 = arith.mulf %78, %81 : vector<8x128xf32>
    %83 = arith.addf %68, %82 : vector<8x128xf32>
    %84 = math.tanh %83 : vector<8x128xf32>
    %85 = arith.mulf %70, %84 : vector<8x128xf32>
    %cst_30 = arith.constant 1.000000e+00 : f32
    %86 = vector.broadcast %cst_30 : f32 to vector<8x128xf32>
    %87 = arith.subf %86, %70 : vector<8x128xf32>
    %88 = arith.mulf %87, %62 : vector<8x128xf32>
    %89 = arith.addf %85, %88 : vector<8x128xf32>
    %c1_i32 = arith.constant 1 : i32
    %c8_i32_31 = arith.constant 8 : i32
    %90 = arith.muli %c1_i32, %c8_i32_31 : i32
    %91 = tpu.assume_multiple %90, 8 : i32
    %92 = arith.index_cast %91 : i32 to index
    %c0_32 = arith.constant 0 : index
    %93 = vector.load %arg6[%92, %c0_32] : memref<64x128xf32, #tpu.memory_space<vmem>>, vector<8x128xf32>
    %94 = arith.index_cast %91 : i32 to index
    %c0_33 = arith.constant 0 : index
    %95 = vector.load %arg7[%94, %c0_33] : memref<64x128xf32, #tpu.memory_space<vmem>>, vector<8x128xf32>
    %96 = arith.index_cast %91 : i32 to index
    %c0_34 = arith.constant 0 : index
    %97 = vector.load %arg8[%96, %c0_34] : memref<64x128xf32, #tpu.memory_space<vmem>>, vector<8x128xf32>
    %cst_35 = arith.constant dense<0.000000e+00> : vector<8x256xf32>
    %98 = tpu.matmul %89, %60, %cst_35 {dimension_numbers = #tpu.dot_dimension_numbers<[1], [0], [0], [1], [0, 0, 1, 1], [], []>} : vector<8x128xf32>, vector<128x256xf32>, vector<8x256xf32> -> vector<8x256xf32>
    %99 = vector.extract_strided_slice %98 {offsets = [0, 0], sizes = [8, 128], strides = [1, 1]} : vector<8x256xf32> to vector<8x128xf32>
    %100 = arith.addf %93, %99 : vector<8x128xf32>
    %101 = arith.negf %100 : vector<8x128xf32>
    %102 = math.exp %101 : vector<8x128xf32>
    %cst_36 = arith.constant 1.000000e+00 : f32
    %103 = vector.broadcast %cst_36 : f32 to vector<8x128xf32>
    %104 = arith.addf %103, %102 : vector<8x128xf32>
    %105 = arith.divf %103, %104 : vector<8x128xf32>
    %106 = vector.extract_strided_slice %98 {offsets = [0, 128], sizes = [8, 128], strides = [1, 1]} : vector<8x256xf32> to vector<8x128xf32>
    %107 = vector.broadcast %61 : vector<1x128xf32> to vector<8x128xf32>
    %108 = arith.addf %106, %107 : vector<8x128xf32>
    %109 = arith.mulf %105, %108 : vector<8x128xf32>
    %110 = arith.addf %95, %109 : vector<8x128xf32>
    %111 = math.tanh %110 : vector<8x128xf32>
    %112 = arith.mulf %97, %111 : vector<8x128xf32>
    %cst_37 = arith.constant 1.000000e+00 : f32
    %113 = vector.broadcast %cst_37 : f32 to vector<8x128xf32>
    %114 = arith.subf %113, %97 : vector<8x128xf32>
    %115 = arith.mulf %114, %89 : vector<8x128xf32>
    %116 = arith.addf %112, %115 : vector<8x128xf32>
    %c2_i32 = arith.constant 2 : i32
    %c8_i32_38 = arith.constant 8 : i32
    %117 = arith.muli %c2_i32, %c8_i32_38 : i32
    %118 = tpu.assume_multiple %117, 8 : i32
    %119 = arith.index_cast %118 : i32 to index
    %c0_39 = arith.constant 0 : index
    %120 = vector.load %arg6[%119, %c0_39] : memref<64x128xf32, #tpu.memory_space<vmem>>, vector<8x128xf32>
    %121 = arith.index_cast %118 : i32 to index
    %c0_40 = arith.constant 0 : index
    %122 = vector.load %arg7[%121, %c0_40] : memref<64x128xf32, #tpu.memory_space<vmem>>, vector<8x128xf32>
    %123 = arith.index_cast %118 : i32 to index
    %c0_41 = arith.constant 0 : index
    %124 = vector.load %arg8[%123, %c0_41] : memref<64x128xf32, #tpu.memory_space<vmem>>, vector<8x128xf32>
    %cst_42 = arith.constant dense<0.000000e+00> : vector<8x256xf32>
    %125 = tpu.matmul %116, %60, %cst_42 {dimension_numbers = #tpu.dot_dimension_numbers<[1], [0], [0], [1], [0, 0, 1, 1], [], []>} : vector<8x128xf32>, vector<128x256xf32>, vector<8x256xf32> -> vector<8x256xf32>
    %126 = vector.extract_strided_slice %125 {offsets = [0, 0], sizes = [8, 128], strides = [1, 1]} : vector<8x256xf32> to vector<8x128xf32>
    %127 = arith.addf %120, %126 : vector<8x128xf32>
    %128 = arith.negf %127 : vector<8x128xf32>
    %129 = math.exp %128 : vector<8x128xf32>
    %cst_43 = arith.constant 1.000000e+00 : f32
    %130 = vector.broadcast %cst_43 : f32 to vector<8x128xf32>
    %131 = arith.addf %130, %129 : vector<8x128xf32>
    %132 = arith.divf %130, %131 : vector<8x128xf32>
    %133 = vector.extract_strided_slice %125 {offsets = [0, 128], sizes = [8, 128], strides = [1, 1]} : vector<8x256xf32> to vector<8x128xf32>
    %134 = vector.broadcast %61 : vector<1x128xf32> to vector<8x128xf32>
    %135 = arith.addf %133, %134 : vector<8x128xf32>
    %136 = arith.mulf %132, %135 : vector<8x128xf32>
    %137 = arith.addf %122, %136 : vector<8x128xf32>
    %138 = math.tanh %137 : vector<8x128xf32>
    %139 = arith.mulf %124, %138 : vector<8x128xf32>
    %cst_44 = arith.constant 1.000000e+00 : f32
    %140 = vector.broadcast %cst_44 : f32 to vector<8x128xf32>
    %141 = arith.subf %140, %124 : vector<8x128xf32>
    %142 = arith.mulf %141, %116 : vector<8x128xf32>
    %143 = arith.addf %139, %142 : vector<8x128xf32>
    %c3_i32 = arith.constant 3 : i32
    %c8_i32_45 = arith.constant 8 : i32
    %144 = arith.muli %c3_i32, %c8_i32_45 : i32
    %145 = tpu.assume_multiple %144, 8 : i32
    %146 = arith.index_cast %145 : i32 to index
    %c0_46 = arith.constant 0 : index
    %147 = vector.load %arg6[%146, %c0_46] : memref<64x128xf32, #tpu.memory_space<vmem>>, vector<8x128xf32>
    %148 = arith.index_cast %145 : i32 to index
    %c0_47 = arith.constant 0 : index
    %149 = vector.load %arg7[%148, %c0_47] : memref<64x128xf32, #tpu.memory_space<vmem>>, vector<8x128xf32>
    %150 = arith.index_cast %145 : i32 to index
    %c0_48 = arith.constant 0 : index
    %151 = vector.load %arg8[%150, %c0_48] : memref<64x128xf32, #tpu.memory_space<vmem>>, vector<8x128xf32>
    %cst_49 = arith.constant dense<0.000000e+00> : vector<8x256xf32>
    %152 = tpu.matmul %143, %60, %cst_49 {dimension_numbers = #tpu.dot_dimension_numbers<[1], [0], [0], [1], [0, 0, 1, 1], [], []>} : vector<8x128xf32>, vector<128x256xf32>, vector<8x256xf32> -> vector<8x256xf32>
    %153 = vector.extract_strided_slice %152 {offsets = [0, 0], sizes = [8, 128], strides = [1, 1]} : vector<8x256xf32> to vector<8x128xf32>
    %154 = arith.addf %147, %153 : vector<8x128xf32>
    %155 = arith.negf %154 : vector<8x128xf32>
    %156 = math.exp %155 : vector<8x128xf32>
    %cst_50 = arith.constant 1.000000e+00 : f32
    %157 = vector.broadcast %cst_50 : f32 to vector<8x128xf32>
    %158 = arith.addf %157, %156 : vector<8x128xf32>
    %159 = arith.divf %157, %158 : vector<8x128xf32>
    %160 = vector.extract_strided_slice %152 {offsets = [0, 128], sizes = [8, 128], strides = [1, 1]} : vector<8x256xf32> to vector<8x128xf32>
    %161 = vector.broadcast %61 : vector<1x128xf32> to vector<8x128xf32>
    %162 = arith.addf %160, %161 : vector<8x128xf32>
    %163 = arith.mulf %159, %162 : vector<8x128xf32>
    %164 = arith.addf %149, %163 : vector<8x128xf32>
    %165 = math.tanh %164 : vector<8x128xf32>
    %166 = arith.mulf %151, %165 : vector<8x128xf32>
    %cst_51 = arith.constant 1.000000e+00 : f32
    %167 = vector.broadcast %cst_51 : f32 to vector<8x128xf32>
    %168 = arith.subf %167, %151 : vector<8x128xf32>
    %169 = arith.mulf %168, %143 : vector<8x128xf32>
    %170 = arith.addf %166, %169 : vector<8x128xf32>
    %c4_i32 = arith.constant 4 : i32
    %c8_i32_52 = arith.constant 8 : i32
    %171 = arith.muli %c4_i32, %c8_i32_52 : i32
    %172 = tpu.assume_multiple %171, 8 : i32
    %173 = arith.index_cast %172 : i32 to index
    %c0_53 = arith.constant 0 : index
    %174 = vector.load %arg6[%173, %c0_53] : memref<64x128xf32, #tpu.memory_space<vmem>>, vector<8x128xf32>
    %175 = arith.index_cast %172 : i32 to index
    %c0_54 = arith.constant 0 : index
    %176 = vector.load %arg7[%175, %c0_54] : memref<64x128xf32, #tpu.memory_space<vmem>>, vector<8x128xf32>
    %177 = arith.index_cast %172 : i32 to index
    %c0_55 = arith.constant 0 : index
    %178 = vector.load %arg8[%177, %c0_55] : memref<64x128xf32, #tpu.memory_space<vmem>>, vector<8x128xf32>
    %cst_56 = arith.constant dense<0.000000e+00> : vector<8x256xf32>
    %179 = tpu.matmul %170, %60, %cst_56 {dimension_numbers = #tpu.dot_dimension_numbers<[1], [0], [0], [1], [0, 0, 1, 1], [], []>} : vector<8x128xf32>, vector<128x256xf32>, vector<8x256xf32> -> vector<8x256xf32>
    %180 = vector.extract_strided_slice %179 {offsets = [0, 0], sizes = [8, 128], strides = [1, 1]} : vector<8x256xf32> to vector<8x128xf32>
    %181 = arith.addf %174, %180 : vector<8x128xf32>
    %182 = arith.negf %181 : vector<8x128xf32>
    %183 = math.exp %182 : vector<8x128xf32>
    %cst_57 = arith.constant 1.000000e+00 : f32
    %184 = vector.broadcast %cst_57 : f32 to vector<8x128xf32>
    %185 = arith.addf %184, %183 : vector<8x128xf32>
    %186 = arith.divf %184, %185 : vector<8x128xf32>
    %187 = vector.extract_strided_slice %179 {offsets = [0, 128], sizes = [8, 128], strides = [1, 1]} : vector<8x256xf32> to vector<8x128xf32>
    %188 = vector.broadcast %61 : vector<1x128xf32> to vector<8x128xf32>
    %189 = arith.addf %187, %188 : vector<8x128xf32>
    %190 = arith.mulf %186, %189 : vector<8x128xf32>
    %191 = arith.addf %176, %190 : vector<8x128xf32>
    %192 = math.tanh %191 : vector<8x128xf32>
    %193 = arith.mulf %178, %192 : vector<8x128xf32>
    %cst_58 = arith.constant 1.000000e+00 : f32
    %194 = vector.broadcast %cst_58 : f32 to vector<8x128xf32>
    %195 = arith.subf %194, %178 : vector<8x128xf32>
    %196 = arith.mulf %195, %170 : vector<8x128xf32>
    %197 = arith.addf %193, %196 : vector<8x128xf32>
    %c5_i32 = arith.constant 5 : i32
    %c8_i32_59 = arith.constant 8 : i32
    %198 = arith.muli %c5_i32, %c8_i32_59 : i32
    %199 = tpu.assume_multiple %198, 8 : i32
    %200 = arith.index_cast %199 : i32 to index
    %c0_60 = arith.constant 0 : index
    %201 = vector.load %arg6[%200, %c0_60] : memref<64x128xf32, #tpu.memory_space<vmem>>, vector<8x128xf32>
    %202 = arith.index_cast %199 : i32 to index
    %c0_61 = arith.constant 0 : index
    %203 = vector.load %arg7[%202, %c0_61] : memref<64x128xf32, #tpu.memory_space<vmem>>, vector<8x128xf32>
    %204 = arith.index_cast %199 : i32 to index
    %c0_62 = arith.constant 0 : index
    %205 = vector.load %arg8[%204, %c0_62] : memref<64x128xf32, #tpu.memory_space<vmem>>, vector<8x128xf32>
    %cst_63 = arith.constant dense<0.000000e+00> : vector<8x256xf32>
    %206 = tpu.matmul %197, %60, %cst_63 {dimension_numbers = #tpu.dot_dimension_numbers<[1], [0], [0], [1], [0, 0, 1, 1], [], []>} : vector<8x128xf32>, vector<128x256xf32>, vector<8x256xf32> -> vector<8x256xf32>
    %207 = vector.extract_strided_slice %206 {offsets = [0, 0], sizes = [8, 128], strides = [1, 1]} : vector<8x256xf32> to vector<8x128xf32>
    %208 = arith.addf %201, %207 : vector<8x128xf32>
    %209 = arith.negf %208 : vector<8x128xf32>
    %210 = math.exp %209 : vector<8x128xf32>
    %cst_64 = arith.constant 1.000000e+00 : f32
    %211 = vector.broadcast %cst_64 : f32 to vector<8x128xf32>
    %212 = arith.addf %211, %210 : vector<8x128xf32>
    %213 = arith.divf %211, %212 : vector<8x128xf32>
    %214 = vector.extract_strided_slice %206 {offsets = [0, 128], sizes = [8, 128], strides = [1, 1]} : vector<8x256xf32> to vector<8x128xf32>
    %215 = vector.broadcast %61 : vector<1x128xf32> to vector<8x128xf32>
    %216 = arith.addf %214, %215 : vector<8x128xf32>
    %217 = arith.mulf %213, %216 : vector<8x128xf32>
    %218 = arith.addf %203, %217 : vector<8x128xf32>
    %219 = math.tanh %218 : vector<8x128xf32>
    %220 = arith.mulf %205, %219 : vector<8x128xf32>
    %cst_65 = arith.constant 1.000000e+00 : f32
    %221 = vector.broadcast %cst_65 : f32 to vector<8x128xf32>
    %222 = arith.subf %221, %205 : vector<8x128xf32>
    %223 = arith.mulf %222, %197 : vector<8x128xf32>
    %224 = arith.addf %220, %223 : vector<8x128xf32>
    %c6_i32 = arith.constant 6 : i32
    %c8_i32_66 = arith.constant 8 : i32
    %225 = arith.muli %c6_i32, %c8_i32_66 : i32
    %226 = tpu.assume_multiple %225, 8 : i32
    %227 = arith.index_cast %226 : i32 to index
    %c0_67 = arith.constant 0 : index
    %228 = vector.load %arg6[%227, %c0_67] : memref<64x128xf32, #tpu.memory_space<vmem>>, vector<8x128xf32>
    %229 = arith.index_cast %226 : i32 to index
    %c0_68 = arith.constant 0 : index
    %230 = vector.load %arg7[%229, %c0_68] : memref<64x128xf32, #tpu.memory_space<vmem>>, vector<8x128xf32>
    %231 = arith.index_cast %226 : i32 to index
    %c0_69 = arith.constant 0 : index
    %232 = vector.load %arg8[%231, %c0_69] : memref<64x128xf32, #tpu.memory_space<vmem>>, vector<8x128xf32>
    %cst_70 = arith.constant dense<0.000000e+00> : vector<8x256xf32>
    %233 = tpu.matmul %224, %60, %cst_70 {dimension_numbers = #tpu.dot_dimension_numbers<[1], [0], [0], [1], [0, 0, 1, 1], [], []>} : vector<8x128xf32>, vector<128x256xf32>, vector<8x256xf32> -> vector<8x256xf32>
    %234 = vector.extract_strided_slice %233 {offsets = [0, 0], sizes = [8, 128], strides = [1, 1]} : vector<8x256xf32> to vector<8x128xf32>
    %235 = arith.addf %228, %234 : vector<8x128xf32>
    %236 = arith.negf %235 : vector<8x128xf32>
    %237 = math.exp %236 : vector<8x128xf32>
    %cst_71 = arith.constant 1.000000e+00 : f32
    %238 = vector.broadcast %cst_71 : f32 to vector<8x128xf32>
    %239 = arith.addf %238, %237 : vector<8x128xf32>
    %240 = arith.divf %238, %239 : vector<8x128xf32>
    %241 = vector.extract_strided_slice %233 {offsets = [0, 128], sizes = [8, 128], strides = [1, 1]} : vector<8x256xf32> to vector<8x128xf32>
    %242 = vector.broadcast %61 : vector<1x128xf32> to vector<8x128xf32>
    %243 = arith.addf %241, %242 : vector<8x128xf32>
    %244 = arith.mulf %240, %243 : vector<8x128xf32>
    %245 = arith.addf %230, %244 : vector<8x128xf32>
    %246 = math.tanh %245 : vector<8x128xf32>
    %247 = arith.mulf %232, %246 : vector<8x128xf32>
    %cst_72 = arith.constant 1.000000e+00 : f32
    %248 = vector.broadcast %cst_72 : f32 to vector<8x128xf32>
    %249 = arith.subf %248, %232 : vector<8x128xf32>
    %250 = arith.mulf %249, %224 : vector<8x128xf32>
    %251 = arith.addf %247, %250 : vector<8x128xf32>
    %c7_i32 = arith.constant 7 : i32
    %c8_i32_73 = arith.constant 8 : i32
    %252 = arith.muli %c7_i32, %c8_i32_73 : i32
    %253 = tpu.assume_multiple %252, 8 : i32
    %254 = arith.index_cast %253 : i32 to index
    %c0_74 = arith.constant 0 : index
    %255 = vector.load %arg6[%254, %c0_74] : memref<64x128xf32, #tpu.memory_space<vmem>>, vector<8x128xf32>
    %256 = arith.index_cast %253 : i32 to index
    %c0_75 = arith.constant 0 : index
    %257 = vector.load %arg7[%256, %c0_75] : memref<64x128xf32, #tpu.memory_space<vmem>>, vector<8x128xf32>
    %258 = arith.index_cast %253 : i32 to index
    %c0_76 = arith.constant 0 : index
    %259 = vector.load %arg8[%258, %c0_76] : memref<64x128xf32, #tpu.memory_space<vmem>>, vector<8x128xf32>
    %cst_77 = arith.constant dense<0.000000e+00> : vector<8x256xf32>
    %260 = tpu.matmul %251, %60, %cst_77 {dimension_numbers = #tpu.dot_dimension_numbers<[1], [0], [0], [1], [0, 0, 1, 1], [], []>} : vector<8x128xf32>, vector<128x256xf32>, vector<8x256xf32> -> vector<8x256xf32>
    %261 = vector.extract_strided_slice %260 {offsets = [0, 0], sizes = [8, 128], strides = [1, 1]} : vector<8x256xf32> to vector<8x128xf32>
    %262 = arith.addf %255, %261 : vector<8x128xf32>
    %263 = arith.negf %262 : vector<8x128xf32>
    %264 = math.exp %263 : vector<8x128xf32>
    %cst_78 = arith.constant 1.000000e+00 : f32
    %265 = vector.broadcast %cst_78 : f32 to vector<8x128xf32>
    %266 = arith.addf %265, %264 : vector<8x128xf32>
    %267 = arith.divf %265, %266 : vector<8x128xf32>
    %268 = vector.extract_strided_slice %260 {offsets = [0, 128], sizes = [8, 128], strides = [1, 1]} : vector<8x256xf32> to vector<8x128xf32>
    %269 = vector.broadcast %61 : vector<1x128xf32> to vector<8x128xf32>
    %270 = arith.addf %268, %269 : vector<8x128xf32>
    %271 = arith.mulf %267, %270 : vector<8x128xf32>
    %272 = arith.addf %257, %271 : vector<8x128xf32>
    %273 = math.tanh %272 : vector<8x128xf32>
    %274 = arith.mulf %259, %273 : vector<8x128xf32>
    %cst_79 = arith.constant 1.000000e+00 : f32
    %275 = vector.broadcast %cst_79 : f32 to vector<8x128xf32>
    %276 = arith.subf %275, %259 : vector<8x128xf32>
    %277 = arith.mulf %276, %251 : vector<8x128xf32>
    %278 = arith.addf %274, %277 : vector<8x128xf32>
    %c8_i32_80 = arith.constant 8 : i32
    %c896 = arith.constant 896 : index
    %c0_81 = arith.constant 0 : index
    %279 = vector.load %arg2[%c896, %c0_81] : memref<1280x128xf32, #tpu.memory_space<vmem>>, vector<128x128xf32>
    %cst_82 = arith.constant dense<0.000000e+00> : vector<8x128xf32>
    %280 = tpu.matmul %3, %279, %cst_82 {dimension_numbers = #tpu.dot_dimension_numbers<[1], [0], [0], [1], [0, 0, 1, 1], [], []>} : vector<8x128xf32>, vector<128x128xf32>, vector<8x128xf32> -> vector<8x128xf32>
    %c1024 = arith.constant 1024 : index
    %c0_83 = arith.constant 0 : index
    %281 = vector.load %arg2[%c1024, %c0_83] : memref<1280x128xf32, #tpu.memory_space<vmem>>, vector<128x128xf32>
    %cst_84 = arith.constant dense<0.000000e+00> : vector<8x128xf32>
    %282 = tpu.matmul %278, %281, %cst_84 {dimension_numbers = #tpu.dot_dimension_numbers<[1], [0], [0], [1], [0, 0, 1, 1], [], []>} : vector<8x128xf32>, vector<128x128xf32>, vector<8x128xf32> -> vector<8x128xf32>
    %283 = arith.addf %280, %282 : vector<8x128xf32>
    %c1152 = arith.constant 1152 : index
    %c0_85 = arith.constant 0 : index
    %284 = vector.load %arg2[%c1152, %c0_85] : memref<1280x128xf32, #tpu.memory_space<vmem>>, vector<128x128xf32>
    %cst_86 = arith.constant dense<0.000000e+00> : vector<8x128xf32>
    %285 = tpu.matmul %2, %284, %cst_86 {dimension_numbers = #tpu.dot_dimension_numbers<[1], [0], [0], [1], [0, 0, 1, 1], [], []>} : vector<8x128xf32>, vector<128x128xf32>, vector<8x128xf32> -> vector<8x128xf32>
    %286 = arith.addf %283, %285 : vector<8x128xf32>
    %287 = vector.extract_strided_slice %4 {offsets = [5, 0], sizes = [1, 128], strides = [1, 1]} : vector<8x128xf32> to vector<1x128xf32>
    %288 = vector.broadcast %287 : vector<1x128xf32> to vector<8x128xf32>
    %289 = arith.addf %286, %288 : vector<8x128xf32>
    %cst_87 = arith.constant 0.000000e+00 : f32
    %290 = vector.broadcast %cst_87 : f32 to vector<8x128xf32>
    %291 = arith.maximumf %289, %290 : vector<8x128xf32>
    %c0_88 = arith.constant 0 : index
    %c0_89 = arith.constant 0 : index
    %292 = vector.load %arg5[%c0_88, %c0_89] : memref<8x128xf32, #tpu.memory_space<vmem>>, vector<8x128xf32>
    tpu.vector_store %arg5[%c0_88, %c0_89], %291 {strides = array<i32>} : memref<8x128xf32, #tpu.memory_space<vmem>>, vector<8x128xf32>,
    return
  }
}

</mosaic_0001>

<llo_original>
// kernel: tpu_custom_call.1
$region0: #{tpu_custom_call.1}
  #allocation0 [shape = 'u32[]', space=smem, size = 0x4, offset = 0x4, fixed_abs, tag = 'smem constant byte address 0x4 - core index']
  #allocation1 [shape = 'u32[144,128]{1,0:T(1,128)}', space=vmem, size = 0x12000, scoped, tag = 'internal scratch']
  #allocation2 [shape = 'f32[64,128]{1,0:T(8,128)}', space=vmem, size = 0x8000, scoped, tag = 'scratch operand']
  #allocation3 [shape = 'f32[64,128]{1,0:T(8,128)}', space=vmem, size = 0x8000, scoped, tag = 'scratch operand']
  #allocation4 [shape = 'f32[64,128]{1,0:T(8,128)}', space=vmem, size = 0x8000, scoped, tag = 'scratch operand']
  %s0 = inlined_call_operand.hbm [shape: f32[64,128], index: 0, kind: input, shape index: {}]
  %s1 = inlined_call_operand.hbm [shape: f32[16,128], index: 1, kind: input, shape index: {}]
  %s2 = inlined_call_operand.hbm [shape: f32[1280,128], index: 2, kind: input, shape index: {}]
  %s3 = inlined_call_operand.hbm [shape: f32[128,256], index: 3, kind: input, shape index: {}]
  %s4 = inlined_call_operand.vmem [shape: f32[8,128], index: 4, kind: input, shape index: {}]
  %s5 = inlined_call_operand.hbm [shape: f32[8,128], index: 5, kind: output, shape index: {}]
  %s6 = sld [smem:[#allocation0]]
  $region46: #{tpu_custom_call.1} parent=0
    _
  %s8 = ssub.s32 1, %s6
  %s9 = scalar_select 0, %s8, %s6
  $region1: #{tpu_custom_call.1} parent=0
    #allocation5 [shape = 'u8[32768]{0}', space=vmem, size = 0x8000, scoped, tag = 'input window, operand 0, single buffered']
    #allocation6 [shape = 's32[1]{0}', space=sflag, size = 0x4, scoped, tag = 'scoped memory for tpu_custom_call.1']
    #allocation7 [shape = 's32[1]{0}', space=sflag, size = 0x4, scoped, tag = 'scoped memory for tpu_custom_call.1']
    #allocation8 [shape = 'u8[8192]{0}', space=vmem, size = 0x2000, scoped, tag = 'input window, operand 1, single buffered']
    #allocation9 [shape = 's32[1]{0}', space=sflag, size = 0x4, scoped, tag = 'scoped memory for tpu_custom_call.1']
    #allocation10 [shape = 'u8[655360]{0}', space=vmem, size = 0xa0000, scoped, tag = 'input window, operand 2, single buffered']
    #allocation11 [shape = 'u8[131072]{0}', space=vmem, size = 0x20000, scoped, tag = 'input window, operand 3, single buffered']
    #allocation12 [shape = 's32[1]{0}', space=sflag, size = 0x4, scoped, tag = 'scoped memory for tpu_custom_call.1']
    #allocation13 [shape = 'u8[4096]{0}', space=vmem, size = 0x1000, scoped, tag = 'output window, operand 0, single buffered']
    %10 = vsyncpa [#allocation6], 0
    %11 = vsyncpa [#allocation9], 0
    %12 = vsyncpa [#allocation12], 0
    %13 = vsyncpa [#allocation7], 0
    // Predicated region
    $region2: #{tpu_custom_call.1} parent=1 // pred_check
      _
    $region3: #{tpu_custom_call.1} parent=1 // pred_check_branch
      %15 = sbr.rel (0) target = $region5
    $region4: #{tpu_custom_call.1} parent=1 // pred_region
      %s17 = ssub.s32 1024, 1024
      %18 = vsyncadd [#allocation6], %s17
      %s19 = sshll.u32 [#allocation5], 4
      %s20 = int_to_ptr.vmem [resolvable:$true] %s19
      %25 = dma.hbm_to_vmem [thread:$0]  %s0, 1024, %s20, [#allocation6], 128, 128, 8
    $region5: #{tpu_custom_call.1} parent=1 // pred_fallthru
      _
    // Predicated region
    $region6: #{tpu_custom_call.1} parent=1 // pred_check
      _
    $region7: #{tpu_custom_call.1} parent=1 // pred_check_branch
      %27 = sbr.rel (0) target = $region9
    $region8: #{tpu_custom_call.1} parent=1 // pred_region
      %s29 = ssub.s32 256, 256
      %30 = vsyncadd [#allocation9], %s29
      %s31 = sshll.u32 [#allocation8], 4
      %s32 = int_to_ptr.vmem [resolvable:$true] %s31
      %37 = dma.hbm_to_vmem [thread:$0]  %s1, 256, %s32, [#allocation9], 128, 128, 8
    $region9: #{tpu_custom_call.1} parent=1 // pred_fallthru
      _
    // Predicated region
    $region10: #{tpu_custom_call.1} parent=1 // pred_check
      _
    $region11: #{tpu_custom_call.1} parent=1 // pred_check_branch
      %39 = sbr.rel (0) target = $region13
    $region12: #{tpu_custom_call.1} parent=1 // pred_region
      %s41 = ssub.s32 20480, 20480
      %42 = vsyncadd [#allocation9], %s41
      %s43 = sshll.u32 [#allocation10], 4
      %s44 = int_to_ptr.vmem [resolvable:$true] %s43
      %49 = dma.hbm_to_vmem [thread:$0]  %s2, 20480, %s44, [#allocation9], 128, 128, 8
    $region13: #{tpu_custom_call.1} parent=1 // pred_fallthru
      _
    // Predicated region
    $region14: #{tpu_custom_call.1} parent=1 // pred_check
      _
    $region15: #{tpu_custom_call.1} parent=1 // pred_check_branch
      %51 = sbr.rel (0) target = $region17
    $region16: #{tpu_custom_call.1} parent=1 // pred_region
      %s53 = ssub.s32 4096, 4096
      %54 = vsyncadd [#allocation12], %s53
      %s55 = sshll.u32 [#allocation11], 4
      %s56 = int_to_ptr.vmem [resolvable:$true] %s55
      %61 = dma.hbm_to_vmem [thread:$0]  %s3, 4096, %s56, [#allocation12], 256, 256, 16
    $region17: #{tpu_custom_call.1} parent=1 // pred_fallthru
      _
    // Predicated region
    $region18: #{tpu_custom_call.1} parent=1 // pred_check
      _
    $region19: #{tpu_custom_call.1} parent=1 // pred_check_branch
      %63 = sbr.rel (0) target = $region21
    $region20: #{tpu_custom_call.1} parent=1 // pred_region
      _
    $region21: #{tpu_custom_call.1} parent=1 // pred_fallthru
      _
    // Predicated region
    $region22: #{tpu_custom_call.1} parent=1 // pred_check
      _
    $region23: #{tpu_custom_call.1} parent=1 // pred_check_branch
      %65 = sbr.rel (0) target = $region25
    $region24: #{tpu_custom_call.1} parent=1 // pred_region
      %66 = dma.done [#allocation6], 1024
    $region25: #{tpu_custom_call.1} parent=1 // pred_fallthru
      _
    // Predicated region
    $region26: #{tpu_custom_call.1} parent=1 // pred_check
      _
    $region27: #{tpu_custom_call.1} parent=1 // pred_check_branch
      %68 = sbr.rel (0) target = $region29
    $region28: #{tpu_custom_call.1} parent=1 // pred_region
      %69 = dma.done [#allocation9], 256
    $region29: #{tpu_custom_call.1} parent=1 // pred_fallthru
      _
    // Predicated region
    $region30: #{tpu_custom_call.1} parent=1 // pred_check
      _
    $region31: #{tpu_custom_call.1} parent=1 // pred_check_branch
      %71 = sbr.rel (0) target = $region33
    $region32: #{tpu_custom_call.1} parent=1 // pred_region
      %72 = dma.done [#allocation9], 20480
    $region33: #{tpu_custom_call.1} parent=1 // pred_fallthru
      _
    // Predicated region
    $region34: #{tpu_custom_call.1} parent=1 // pred_check
      _
    $region35: #{tpu_custom_call.1} parent=1 // pred_check_branch
      %74 = sbr.rel (0) target = $region37
    $region36: #{tpu_custom_call.1} parent=1 // pred_region
      %75 = dma.done [#allocation12], 4096
    $region37: #{tpu_custom_call.1} parent=1 // pred_fallthru
      _
    %v76 = vld [vmem:[#allocation5] sm:$0xff]
    %v77 = vld [vmem:[#allocation5 + $0x8] sm:$0xff]
    %v78 = vld [vmem:[#allocation5 + $0x10] sm:$0xff]
    %v79 = vld [vmem:[#allocation5 + $0x18] sm:$0xff]
    %v80 = vld [vmem:[#allocation5 + $0x20] sm:$0xff]
    %v81 = vld [vmem:[#allocation5 + $0x28] sm:$0xff]
    %v82 = vld [vmem:[#allocation5 + $0x30] sm:$0xff]
    %v83 = vld [vmem:[#allocation5 + $0x38] sm:$0xff]
    %v84 = vld [vmem:[#allocation8] sm:$0xff]
    %v85 = vld [vmem:[#allocation8 + $0x8] sm:$0xff]
    %v86 = vld [vmem:[%s4] sm:$0xff]
    %v87 = vmul.f32 %v76, %v84
    %v88 = vmul.f32 %v77, %v84
    %v89 = vmul.f32 %v78, %v84
    %v90 = vmul.f32 %v79, %v84
    %v91 = vmul.f32 %v80, %v84
    %v92 = vmul.f32 %v81, %v84
    %v93 = vmul.f32 %v82, %v84
    %v94 = vmul.f32 %v83, %v84
    %v95 = vmul.f32 %v76, %v85
    %v96 = vmul.f32 %v77, %v85
    %v97 = vmul.f32 %v78, %v85
    %v98 = vmul.f32 %v79, %v85
    %v99 = vmul.f32 %v80, %v85
    %v100 = vmul.f32 %v81, %v85
    %v101 = vmul.f32 %v82, %v85
    %v102 = vmul.f32 %v83, %v85
    %v103 = vsub.f32 %v76, %v84
    %v104 = vsub.f32 %v77, %v84
    %v105 = vsub.f32 %v78, %v84
    %v106 = vsub.f32 %v79, %v84
    %v107 = vsub.f32 %v80, %v84
    %v108 = vsub.f32 %v81, %v84
    %v109 = vsub.f32 %v82, %v84
    %v110 = vsub.f32 %v83, %v84
    %v111 = vand.u32 2147483647, %v103
    %v112 = vand.u32 2147483647, %v104
    %v113 = vand.u32 2147483647, %v105
    %v114 = vand.u32 2147483647, %v106
    %v115 = vand.u32 2147483647, %v107
    %v116 = vand.u32 2147483647, %v108
    %v117 = vand.u32 2147483647, %v109
    %v118 = vand.u32 2147483647, %v110
    %v119 = vsub.f32 %v76, %v85
    %v120 = vsub.f32 %v77, %v85
    %v121 = vsub.f32 %v78, %v85
    %v122 = vsub.f32 %v79, %v85
    %v123 = vsub.f32 %v80, %v85
    %v124 = vsub.f32 %v81, %v85
    %v125 = vsub.f32 %v82, %v85
    %v126 = vsub.f32 %v83, %v85
    %v127 = vand.u32 2147483647, %v119
    %v128 = vand.u32 2147483647, %v120
    %v129 = vand.u32 2147483647, %v121
    %v130 = vand.u32 2147483647, %v122
    %v131 = vand.u32 2147483647, %v123
    %v132 = vand.u32 2147483647, %v124
    %v133 = vand.u32 2147483647, %v125
    %v134 = vand.u32 2147483647, %v126
    %v135 = vld [vmem:[#allocation10] sm:$0xff]
    %v136 = vld [vmem:[#allocation10 + $0x8] sm:$0xff]
    %v137 = vld [vmem:[#allocation10 + $0x10] sm:$0xff]
    %v138 = vld [vmem:[#allocation10 + $0x18] sm:$0xff]
    %v139 = vld [vmem:[#allocation10 + $0x20] sm:$0xff]
    %v140 = vld [vmem:[#allocation10 + $0x28] sm:$0xff]
    %v141 = vld [vmem:[#allocation10 + $0x30] sm:$0xff]
    %v142 = vld [vmem:[#allocation10 + $0x38] sm:$0xff]
    %v143 = vld [vmem:[#allocation10 + $0x40] sm:$0xff]
    %v144 = vld [vmem:[#allocation10 + $0x48] sm:$0xff]
    %v145 = vld [vmem:[#allocation10 + $0x50] sm:$0xff]
    %v146 = vld [vmem:[#allocation10 + $0x58] sm:$0xff]
    %v147 = vld [vmem:[#allocation10 + $0x60] sm:$0xff]
    %v148 = vld [vmem:[#allocation10 + $0x68] sm:$0xff]
    %v149 = vld [vmem:[#allocation10 + $0x70] sm:$0xff]
    %v150 = vld [vmem:[#allocation10 + $0x78] sm:$0xff]
    %v151 = vld [vmem:[#allocation10 + $0x80] sm:$0xff]
    %v152 = vld [vmem:[#allocation10 + $0x88] sm:$0xff]
    %v153 = vld [vmem:[#allocation10 + $0x90] sm:$0xff]
    %v154 = vld [vmem:[#allocation10 + $0x98] sm:$0xff]
    %v155 = vld [vmem:[#allocation10 + $0xa0] sm:$0xff]
    %v156 = vld [vmem:[#allocation10 + $0xa8] sm:$0xff]
    %v157 = vld [vmem:[#allocation10 + $0xb0] sm:$0xff]
    %v158 = vld [vmem:[#allocation10 + $0xb8] sm:$0xff]
    %v159 = vld [vmem:[#allocation10 + $0xc0] sm:$0xff]
    %v160 = vld [vmem:[#allocation10 + $0xc8] sm:$0xff]
    %v161 = vld [vmem:[#allocation10 + $0xd0] sm:$0xff]
    %v162 = vld [vmem:[#allocation10 + $0xd8] sm:$0xff]
    %v163 = vld [vmem:[#allocation10 + $0xe0] sm:$0xff]
    %v164 = vld [vmem:[#allocation10 + $0xe8] sm:$0xff]
    %v165 = vld [vmem:[#allocation10 + $0xf0] sm:$0xff]
    %v166 = vld [vmem:[#allocation10 + $0xf8] sm:$0xff]
    %v167 = vld [vmem:[#allocation10 + $0x100] sm:$0xff]
    %v168 = vld [vmem:[#allocation10 + $0x108] sm:$0xff]
    %v169 = vld [vmem:[#allocation10 + $0x110] sm:$0xff]
    %v170 = vld [vmem:[#allocation10 + $0x118] sm:$0xff]
    %v171 = vld [vmem:[#allocation10 + $0x120] sm:$0xff]
    %v172 = vld [vmem:[#allocation10 + $0x128] sm:$0xff]
    %v173 = vld [vmem:[#allocation10 + $0x130] sm:$0xff]
    %v174 = vld [vmem:[#allocation10 + $0x138] sm:$0xff]
    %v175 = vld [vmem:[#allocation10 + $0x140] sm:$0xff]
    %v176 = vld [vmem:[#allocation10 + $0x148] sm:$0xff]
    %v177 = vld [vmem:[#allocation10 + $0x150] sm:$0xff]
    %v178 = vld [vmem:[#allocation10 + $0x158] sm:$0xff]
    %v179 = vld [vmem:[#allocation10 + $0x160] sm:$0xff]
    %v180 = vld [vmem:[#allocation10 + $0x168] sm:$0xff]
    %v181 = vld [vmem:[#allocation10 + $0x170] sm:$0xff]
    %v182 = vld [vmem:[#allocation10 + $0x178] sm:$0xff]
    %v183 = vld [vmem:[#allocation10 + $0x180] sm:$0xff]
    %v184 = vld [vmem:[#allocation10 + $0x188] sm:$0xff]
    %v185 = vld [vmem:[#allocation10 + $0x190] sm:$0xff]
    %v186 = vld [vmem:[#allocation10 + $0x198] sm:$0xff]
    %v187 = vld [vmem:[#allocation10 + $0x1a0] sm:$0xff]
    %v188 = vld [vmem:[#allocation10 + $0x1a8] sm:$0xff]
    %v189 = vld [vmem:[#allocation10 + $0x1b0] sm:$0xff]
    %v190 = vld [vmem:[#allocation10 + $0x1b8] sm:$0xff]
    %v191 = vld [vmem:[#allocation10 + $0x1c0] sm:$0xff]
    %v192 = vld [vmem:[#allocation10 + $0x1c8] sm:$0xff]
    %v193 = vld [vmem:[#allocation10 + $0x1d0] sm:$0xff]
    %v194 = vld [vmem:[#allocation10 + $0x1d8] sm:$0xff]
    %v195 = vld [vmem:[#allocation10 + $0x1e0] sm:$0xff]
    %v196 = vld [vmem:[#allocation10 + $0x1e8] sm:$0xff]
    %v197 = vld [vmem:[#allocation10 + $0x1f0] sm:$0xff]
    %v198 = vld [vmem:[#allocation10 + $0x1f8] sm:$0xff]
    %v199 = vlaneseq
    %v200 = vshrl.u32 %v199, 7
    %v201 = vsub.s32 0, %v200
    %v202 = vrot.slane %v86, %v201
    %203 = vmatprep.subr.mxu0 0.0
    %204 = vmatpush1.msra.mxu0 %v135
    %205 = vmatprep.subr.mxu0 0.0
    %206 = vmatpush1.msra.mxu0 %v136
    %207 = vmatprep.subr.mxu0 0.0
    %208 = vmatpush1.msra.mxu0 %v137
    %209 = vmatprep.subr.mxu0 0.0
    %210 = vmatpush1.msra.mxu0 %v138
    %211 = vmatprep.subr.mxu0 0.0
    %212 = vmatpush1.msra.mxu0 %v139
    %213 = vmatprep.subr.mxu0 0.0
    %214 = vmatpush1.msra.mxu0 %v140
    %215 = vmatprep.subr.mxu0 0.0
    %216 = vmatpush1.msra.mxu0 %v141
    %217 = vmatprep.subr.mxu0 0.0
    %218 = vmatpush1.msra.mxu0 %v142
    %219 = vmatprep.subr.mxu0 0.0
    %220 = vmatpush1.msra.mxu0 %v143
    %221 = vmatprep.subr.mxu0 0.0
    %222 = vmatpush1.msra.mxu0 %v144
    %223 = vmatprep.subr.mxu0 0.0
    %224 = vmatpush1.msra.mxu0 %v145
    %225 = vmatprep.subr.mxu0 0.0
    %226 = vmatpush1.msra.mxu0 %v146
    %227 = vmatprep.subr.mxu0 0.0
    %228 = vmatpush1.msra.mxu0 %v147
    %229 = vmatprep.subr.mxu0 0.0
    %230 = vmatpush1.msra.mxu0 %v148
    %231 = vmatprep.subr.mxu0 0.0
    %232 = vmatpush1.msra.mxu0 %v149
    %233 = vmatprep.subr.mxu0 0.0
    %234 = vmatpush1.msra.mxu0 %v150
    %235 = vmatprep.subr.mxu0 0.0
    %236 = vmatpush1.msra.mxu0 %v151
    %237 = vmatprep.subr.mxu0 0.0
    %238 = vmatpush1.msra.mxu0 %v152
    %239 = vmatprep.subr.mxu0 0.0
    %240 = vmatpush1.msra.mxu0 %v153
    %241 = vmatprep.subr.mxu0 0.0
    %242 = vmatpush1.msra.mxu0 %v154
    %243 = vmatprep.subr.mxu0 0.0
    %244 = vmatpush1.msra.mxu0 %v155
    %245 = vmatprep.subr.mxu0 0.0
    %246 = vmatpush1.msra.mxu0 %v156
    %247 = vmatprep.subr.mxu0 0.0
    %248 = vmatpush1.msra.mxu0 %v157
    %249 = vmatprep.subr.mxu0 0.0
    %250 = vmatpush1.msra.mxu0 %v158
    %251 = vmatprep.subr.mxu0 0.0
    %252 = vmatpush1.msra.mxu0 %v159
    %253 = vmatprep.subr.mxu0 0.0
    %254 = vmatpush1.msra.mxu0 %v160
    %255 = vmatprep.subr.mxu0 0.0
    %256 = vmatpush1.msra.mxu0 %v161
    %257 = vmatprep.subr.mxu0 0.0
    %258 = vmatpush1.msra.mxu0 %v162
    %259 = vmatprep.subr.mxu0 0.0
    %260 = vmatpush1.msra.mxu0 %v163
    %261 = vmatprep.subr.mxu0 0.0
    %262 = vmatpush1.msra.mxu0 %v164
    %263 = vmatprep.subr.mxu0 0.0
    %264 = vmatpush1.msra.mxu0 %v165
    %265 = vmatprep.subr.mxu0 0.0
    %266 = vmatpush1.msra.mxu0 %v166
    %267 = vmatprep.mubr.f32.mxu0 %v95
    %268 = vmatmul.mubr.f32.gmra.mrb[0].mxu0 %v87
    %v269 = vpop.f32.mrb[0].mxu0
    %v270 = vadd.f32 %v202, %v269
    %v271 = vpop.f32.mrb[0].mxu0
    %272 = vmatprep.mubr.f32.mxu0 %v96
    %273 = vmatmul.mubr.f32.gmra.mrb[0].mxu0 %v88
    %v274 = vpop.f32.mrb[0].mxu0
    %v275 = vadd.f32 %v202, %v274
    %v276 = vpop.f32.mrb[0].mxu0
    %277 = vmatprep.mubr.f32.mxu0 %v97
    %278 = vmatmul.mubr.f32.gmra.mrb[0].mxu0 %v89
    %v279 = vpop.f32.mrb[0].mxu0
    %v280 = vadd.f32 %v202, %v279
    %v281 = vpop.f32.mrb[0].mxu0
    %282 = vmatprep.mubr.f32.mxu0 %v98
    %283 = vmatmul.mubr.f32.gmra.mrb[0].mxu0 %v90
    %v284 = vpop.f32.mrb[0].mxu0
    %v285 = vadd.f32 %v202, %v284
    %v286 = vpop.f32.mrb[0].mxu0
    %287 = vmatprep.mubr.f32.mxu0 %v99
    %288 = vmatmul.mubr.f32.gmra.mrb[0].mxu0 %v91
    %v289 = vpop.f32.mrb[0].mxu0
    %v290 = vadd.f32 %v202, %v289
    %v291 = vpop.f32.mrb[0].mxu0
    %292 = vmatprep.mubr.f32.mxu0 %v100
    %293 = vmatmul.mubr.f32.gmra.mrb[0].mxu0 %v92
    %v294 = vpop.f32.mrb[0].mxu0
    %v295 = vadd.f32 %v202, %v294
    %v296 = vpop.f32.mrb[0].mxu0
    %297 = vmatprep.mubr.f32.mxu0 %v101
    %298 = vmatmul.mubr.f32.gmra.mrb[0].mxu0 %v93
    %v299 = vpop.f32.mrb[0].mxu0
    %v300 = vadd.f32 %v202, %v299
    %v301 = vpop.f32.mrb[0].mxu0
    %302 = vmatprep.mubr.f32.mxu0 %v102
    %303 = vmatmul.mubr.f32.gmra.mrb[0].mxu0 %v94
    %v304 = vpop.f32.mrb[0].mxu0
    %v305 = vadd.f32 %v202, %v304
    %v306 = vpop.f32.mrb[0].mxu0
    %307 = vdwg.mxu0
    %308 = vmatprep.subr.mxu0 0.0
    %309 = vmatpush1.msra.mxu0 %v167
    %310 = vmatprep.subr.mxu0 0.0
    %311 = vmatpush1.msra.mxu0 %v168
    %312 = vmatprep.subr.mxu0 0.0
    %313 = vmatpush1.msra.mxu0 %v169
    %314 = vmatprep.subr.mxu0 0.0
    %315 = vmatpush1.msra.mxu0 %v170
    %316 = vmatprep.subr.mxu0 0.0
    %317 = vmatpush1.msra.mxu0 %v171
    %318 = vmatprep.subr.mxu0 0.0
    %319 = vmatpush1.msra.mxu0 %v172
    %320 = vmatprep.subr.mxu0 0.0
    %321 = vmatpush1.msra.mxu0 %v173
    %322 = vmatprep.subr.mxu0 0.0
    %323 = vmatpush1.msra.mxu0 %v174
    %324 = vmatprep.subr.mxu0 0.0
    %325 = vmatpush1.msra.mxu0 %v175
    %326 = vmatprep.subr.mxu0 0.0
    %327 = vmatpush1.msra.mxu0 %v176
    %328 = vmatprep.subr.mxu0 0.0
    %329 = vmatpush1.msra.mxu0 %v177
    %330 = vmatprep.subr.mxu0 0.0
    %331 = vmatpush1.msra.mxu0 %v178
    %332 = vmatprep.subr.mxu0 0.0
    %333 = vmatpush1.msra.mxu0 %v179
    %334 = vmatprep.subr.mxu0 0.0
    %335 = vmatpush1.msra.mxu0 %v180
    %336 = vmatprep.subr.mxu0 0.0
    %337 = vmatpush1.msra.mxu0 %v181
    %338 = vmatprep.subr.mxu0 0.0
    %339 = vmatpush1.msra.mxu0 %v182
    %340 = vmatprep.subr.mxu0 0.0
    %341 = vmatpush1.msra.mxu0 %v183
    %342 = vmatprep.subr.mxu0 0.0
    %343 = vmatpush1.msra.mxu0 %v184
    %344 = vmatprep.subr.mxu0 0.0
    %345 = vmatpush1.msra.mxu0 %v185
    %346 = vmatprep.subr.mxu0 0.0
    %347 = vmatpush1.msra.mxu0 %v186
    %348 = vmatprep.subr.mxu0 0.0
    %349 = vmatpush1.msra.mxu0 %v187
    %350 = vmatprep.subr.mxu0 0.0
    %351 = vmatpush1.msra.mxu0 %v188
    %352 = vmatprep.subr.mxu0 0.0
    %353 = vmatpush1.msra.mxu0 %v189
    %354 = vmatprep.subr.mxu0 0.0
    %355 = vmatpush1.msra.mxu0 %v190
    %356 = vmatprep.subr.mxu0 0.0
    %357 = vmatpush1.msra.mxu0 %v191
    %358 = vmatprep.subr.mxu0 0.0
    %359 = vmatpush1.msra.mxu0 %v192
    %360 = vmatprep.subr.mxu0 0.0
    %361 = vmatpush1.msra.mxu0 %v193
    %362 = vmatprep.subr.mxu0 0.0
    %363 = vmatpush1.msra.mxu0 %v194
    %364 = vmatprep.subr.mxu0 0.0
    %365 = vmatpush1.msra.mxu0 %v195
    %366 = vmatprep.subr.mxu0 0.0
    %367 = vmatpush1.msra.mxu0 %v196
    %368 = vmatprep.subr.mxu0 0.0
    %369 = vmatpush1.msra.mxu0 %v197
    %370 = vmatprep.subr.mxu0 0.0
    %371 = vmatpush1.msra.mxu0 %v198
    %372 = vmatprep.mubr.f32.mxu0 %v127
    %373 = vmatmul.mubr.f32.gmra.mrb[0].mxu0 %v111
    %v374 = vpop.f32.mrb[0].mxu0
    %v375 = vadd.f32 %v270, %v374
    %v376 = vpop.f32.mrb[0].mxu0
    %377 = vmatprep.mubr.f32.mxu0 %v128
    %378 = vmatmul.mubr.f32.gmra.mrb[0].mxu0 %v112
    %v379 = vpop.f32.mrb[0].mxu0
    %v380 = vadd.f32 %v275, %v379
    %v381 = vpop.f32.mrb[0].mxu0
    %382 = vmatprep.mubr.f32.mxu0 %v129
    %383 = vmatmul.mubr.f32.gmra.mrb[0].mxu0 %v113
    %v384 = vpop.f32.mrb[0].mxu0
    %v385 = vadd.f32 %v280, %v384
    %v386 = vpop.f32.mrb[0].mxu0
    %387 = vmatprep.mubr.f32.mxu0 %v130
    %388 = vmatmul.mubr.f32.gmra.mrb[0].mxu0 %v114
    %v389 = vpop.f32.mrb[0].mxu0
    %v390 = vadd.f32 %v285, %v389
    %v391 = vpop.f32.mrb[0].mxu0
    %392 = vmatprep.mubr.f32.mxu0 %v131
    %393 = vmatmul.mubr.f32.gmra.mrb[0].mxu0 %v115
    %v394 = vpop.f32.mrb[0].mxu0
    %v395 = vadd.f32 %v290, %v394
    %v396 = vpop.f32.mrb[0].mxu0
    %397 = vmatprep.mubr.f32.mxu0 %v132
    %398 = vmatmul.mubr.f32.gmra.mrb[0].mxu0 %v116
    %v399 = vpop.f32.mrb[0].mxu0
    %v400 = vadd.f32 %v295, %v399
    %v401 = vpop.f32.mrb[0].mxu0
    %402 = vmatprep.mubr.f32.mxu0 %v133
    %403 = vmatmul.mubr.f32.gmra.mrb[0].mxu0 %v117
    %v404 = vpop.f32.mrb[0].mxu0
    %v405 = vadd.f32 %v300, %v404
    %v406 = vpop.f32.mrb[0].mxu0
    %407 = vmatprep.mubr.f32.mxu0 %v134
    %408 = vmatmul.mubr.f32.gmra.mrb[0].mxu0 %v118
    %v409 = vpop.f32.mrb[0].mxu0
    %v410 = vadd.f32 %v305, %v409
    %v411 = vpop.f32.mrb[0].mxu0
    %412 = vdwg.mxu0
    %v413 = vtanh.pop %v375
    %v414 = vtanh.pop %v380
    %v415 = vtanh.pop %v385
    %v416 = vtanh.pop %v390
    %v417 = vtanh.pop %v395
    %v418 = vtanh.pop %v400
    %v419 = vtanh.pop %v405
    %v420 = vtanh.pop %v410
    %v421 = vld [vmem:[#allocation10 + $0x200] sm:$0xff]
    %v422 = vld [vmem:[#allocation10 + $0x208] sm:$0xff]
    %v423 = vld [vmem:[#allocation10 + $0x210] sm:$0xff]
    %v424 = vld [vmem:[#allocation10 + $0x218] sm:$0xff]
    %v425 = vld [vmem:[#allocation10 + $0x220] sm:$0xff]
    %v426 = vld [vmem:[#allocation10 + $0x228] sm:$0xff]
    %v427 = vld [vmem:[#allocation10 + $0x230] sm:$0xff]
    %v428 = vld [vmem:[#allocation10 + $0x238] sm:$0xff]
    %v429 = vld [vmem:[#allocation10 + $0x240] sm:$0xff]
    %v430 = vld [vmem:[#allocation10 + $0x248] sm:$0xff]
    %v431 = vld [vmem:[#allocation10 + $0x250] sm:$0xff]
    %v432 = vld [vmem:[#allocation10 + $0x258] sm:$0xff]
    %v433 = vld [vmem:[#allocation10 + $0x260] sm:$0xff]
    %v434 = vld [vmem:[#allocation10 + $0x268] sm:$0xff]
    %v435 = vld [vmem:[#allocation10 + $0x270] sm:$0xff]
    %v436 = vld [vmem:[#allocation10 + $0x278] sm:$0xff]
    %v437 = vlaneseq
    %v438 = vshrl.u32 %v437, 7
    %v439 = vsub.s32 1, %v438
    %v440 = vrot.slane %v86, %v439
    %441 = vmatprep.subr.mxu0 0.0
    %442 = vmatpush1.msra.mxu0 %v421
    %443 = vmatprep.subr.mxu0 0.0
    %444 = vmatpush1.msra.mxu0 %v422
    %445 = vmatprep.subr.mxu0 0.0
    %446 = vmatpush1.msra.mxu0 %v423
    %447 = vmatprep.subr.mxu0 0.0
    %448 = vmatpush1.msra.mxu0 %v424
    %449 = vmatprep.subr.mxu0 0.0
    %450 = vmatpush1.msra.mxu0 %v425
    %451 = vmatprep.subr.mxu0 0.0
    %452 = vmatpush1.msra.mxu0 %v426
    %453 = vmatprep.subr.mxu0 0.0
    %454 = vmatpush1.msra.mxu0 %v427
    %455 = vmatprep.subr.mxu0 0.0
    %456 = vmatpush1.msra.mxu0 %v428
    %457 = vmatprep.subr.mxu0 0.0
    %458 = vmatpush1.msra.mxu0 %v429
    %459 = vmatprep.subr.mxu0 0.0
    %460 = vmatpush1.msra.mxu0 %v430
    %461 = vmatprep.subr.mxu0 0.0
    %462 = vmatpush1.msra.mxu0 %v431
    %463 = vmatprep.subr.mxu0 0.0
    %464 = vmatpush1.msra.mxu0 %v432
    %465 = vmatprep.subr.mxu0 0.0
    %466 = vmatpush1.msra.mxu0 %v433
    %467 = vmatprep.subr.mxu0 0.0
    %468 = vmatpush1.msra.mxu0 %v434
    %469 = vmatprep.subr.mxu0 0.0
    %470 = vmatpush1.msra.mxu0 %v435
    %471 = vmatprep.subr.mxu0 0.0
    %472 = vmatpush1.msra.mxu0 %v436
    %473 = vmatprep.subr.mxu0 0.0
    %474 = vmatpush1.msra.mxu0 0.0
    %475 = vmatprep.subr.mxu0 0.0
    %476 = vmatpush1.msra.mxu0 0.0
    %477 = vmatprep.subr.mxu0 0.0
    %478 = vmatpush1.msra.mxu0 0.0
    %479 = vmatprep.subr.mxu0 0.0
    %480 = vmatpush1.msra.mxu0 0.0
    %481 = vmatprep.subr.mxu0 0.0
    %482 = vmatpush1.msra.mxu0 0.0
    %483 = vmatprep.subr.mxu0 0.0
    %484 = vmatpush1.msra.mxu0 0.0
    %485 = vmatprep.subr.mxu0 0.0
    %486 = vmatpush1.msra.mxu0 0.0
    %487 = vmatprep.subr.mxu0 0.0
    %488 = vmatpush1.msra.mxu0 0.0
    %489 = vmatprep.subr.mxu0 0.0
    %490 = vmatpush1.msra.mxu0 0.0
    %491 = vmatprep.subr.mxu0 0.0
    %492 = vmatpush1.msra.mxu0 0.0
    %493 = vmatprep.subr.mxu0 0.0
    %494 = vmatpush1.msra.mxu0 0.0
    %495 = vmatprep.subr.mxu0 0.0
    %496 = vmatpush1.msra.mxu0 0.0
    %497 = vmatprep.subr.mxu0 0.0
    %498 = vmatpush1.msra.mxu0 0.0
    %499 = vmatprep.subr.mxu0 0.0
    %500 = vmatpush1.msra.mxu0 0.0
    %501 = vmatprep.subr.mxu0 0.0
    %502 = vmatpush1.msra.mxu0 0.0
    %503 = vmatprep.subr.mxu0 0.0
    %504 = vmatpush1.msra.mxu0 0.0
    %505 = vmatprep.mubr.f32.mxu0 0.0
    %506 = vmatmul.mubr.f32.gmra.mrb[0].mxu0 %v413
    %v507 = vpop.f32.mrb[0].mxu0
    %v508 = vadd.f32 %v440, %v507
    %v509 = vpop.f32.mrb[0].mxu0
    %510 = vmatprep.mubr.f32.mxu0 0.0
    %511 = vmatmul.mubr.f32.gmra.mrb[0].mxu0 %v414
    %v512 = vpop.f32.mrb[0].mxu0
    %v513 = vadd.f32 %v440, %v512
    %v514 = vpop.f32.mrb[0].mxu0
    %515 = vmatprep.mubr.f32.mxu0 0.0
    %516 = vmatmul.mubr.f32.gmra.mrb[0].mxu0 %v415
    %v517 = vpop.f32.mrb[0].mxu0
    %v518 = vadd.f32 %v440, %v517
    %v519 = vpop.f32.mrb[0].mxu0
    %520 = vmatprep.mubr.f32.mxu0 0.0
    %521 = vmatmul.mubr.f32.gmra.mrb[0].mxu0 %v416
    %v522 = vpop.f32.mrb[0].mxu0
    %v523 = vadd.f32 %v440, %v522
    %v524 = vpop.f32.mrb[0].mxu0
    %525 = vmatprep.mubr.f32.mxu0 0.0
    %526 = vmatmul.mubr.f32.gmra.mrb[0].mxu0 %v417
    %v527 = vpop.f32.mrb[0].mxu0
    %v528 = vadd.f32 %v440, %v527
    %v529 = vpop.f32.mrb[0].mxu0
    %530 = vmatprep.mubr.f32.mxu0 0.0
    %531 = vmatmul.mubr.f32.gmra.mrb[0].mxu0 %v418
    %v532 = vpop.f32.mrb[0].mxu0
    %v533 = vadd.f32 %v440, %v532
    %v534 = vpop.f32.mrb[0].mxu0
    %535 = vmatprep.mubr.f32.mxu0 0.0
    %536 = vmatmul.mubr.f32.gmra.mrb[0].mxu0 %v419
    %v537 = vpop.f32.mrb[0].mxu0
    %v538 = vadd.f32 %v440, %v537
    %v539 = vpop.f32.mrb[0].mxu0
    %540 = vmatprep.mubr.f32.mxu0 0.0
    %541 = vmatmul.mubr.f32.gmra.mrb[0].mxu0 %v420
    %v542 = vpop.f32.mrb[0].mxu0
    %v543 = vadd.f32 %v440, %v542
    %v544 = vpop.f32.mrb[0].mxu0
    %545 = vdwg.mxu0
    %v546 = vmax.f32 %v508, %v528
    %v547 = vmax.f32 %v513, %v533
    %v548 = vmax.f32 %v518, %v538
    %v549 = vmax.f32 %v523, %v543
    %v550 = vmax.f32 %v546, %v547
    %v551 = vmax.f32 %v548, %v549
    %v552 = vmax.f32 %v550, %v551
    %v553 = vsub.f32 %v508, %v552
    %v554 = vsub.f32 %v513, %v552
    %v555 = vsub.f32 %v518, %v552
    %v556 = vsub.f32 %v523, %v552
    %v557 = vsub.f32 %v528, %v552
    %v558 = vsub.f32 %v533, %v552
    %v559 = vsub.f32 %v538, %v552
    %v560 = vsub.f32 %v543, %v552
    %v561 = vmul.f32 %v553, 1.442695
    %v562 = vpow.pop %v561
    %v563 = vmul.f32 %v554, 1.442695
    %v564 = vpow.pop %v563
    %v565 = vmul.f32 %v555, 1.442695
    %v566 = vpow.pop %v565
    %v567 = vmul.f32 %v556, 1.442695
    %v568 = vpow.pop %v567
    %v569 = vmul.f32 %v557, 1.442695
    %v570 = vpow.pop %v569
    %v571 = vmul.f32 %v558, 1.442695
    %v572 = vpow.pop %v571
    %v573 = vmul.f32 %v559, 1.442695
    %v574 = vpow.pop %v573
    %v575 = vmul.f32 %v560, 1.442695
    %v576 = vpow.pop %v575
    %v577 = vadd.f32 %v562, %v564
    %v578 = vadd.f32 %v577, %v566
    %v579 = vadd.f32 %v578, %v568
    %v580 = vadd.f32 %v579, %v570
    %v581 = vadd.f32 %v580, %v572
    %v582 = vadd.f32 %v581, %v574
    %v583 = vadd.f32 %v582, %v576
    %v584 = vrcp.pop %v583
    %v585 = vmul.f32 %v562, %v584
    %v586 = vmul.f32 %v564, %v584
    %v587 = vmul.f32 %v566, %v584
    %v588 = vmul.f32 %v568, %v584
    %v589 = vmul.f32 %v570, %v584
    %v590 = vmul.f32 %v572, %v584
    %v591 = vmul.f32 %v574, %v584
    %v592 = vmul.f32 %v576, %v584
    %593 = vst [vmem:[#allocation4] sm:$0xff] %v585
    %594 = vst [vmem:[#allocation4 + $0x8] sm:$0xff] %v586
    %595 = vst [vmem:[#allocation4 + $0x10] sm:$0xff] %v587
    %596 = vst [vmem:[#allocation4 + $0x18] sm:$0xff] %v588
    %597 = vst [vmem:[#allocation4 + $0x20] sm:$0xff] %v589
    %598 = vst [vmem:[#allocation4 + $0x28] sm:$0xff] %v590
    %599 = vst [vmem:[#allocation4 + $0x30] sm:$0xff] %v591
    %600 = vst [vmem:[#allocation4 + $0x38] sm:$0xff] %v592
    %v601 = vld [vmem:[#allocation10 + $0x280] sm:$0xff]
    %v602 = vld [vmem:[#allocation10 + $0x288] sm:$0xff]
    %v603 = vld [vmem:[#allocation10 + $0x290] sm:$0xff]
    %v604 = vld [vmem:[#allocation10 + $0x298] sm:$0xff]
    %v605 = vld [vmem:[#allocation10 + $0x2a0] sm:$0xff]
    %v606 = vld [vmem:[#allocation10 + $0x2a8] sm:$0xff]
    %v607 = vld [vmem:[#allocation10 + $0x2b0] sm:$0xff]
    %v608 = vld [vmem:[#allocation10 + $0x2b8] sm:$0xff]
    %v609 = vld [vmem:[#allocation10 + $0x2c0] sm:$0xff]
    %v610 = vld [vmem:[#allocation10 + $0x2c8] sm:$0xff]
    %v611 = vld [vmem:[#allocation10 + $0x2d0] sm:$0xff]
    %v612 = vld [vmem:[#allocation10 + $0x2d8] sm:$0xff]
    %v613 = vld [vmem:[#allocation10 + $0x2e0] sm:$0xff]
    %v614 = vld [vmem:[#allocation10 + $0x2e8] sm:$0xff]
    %v615 = vld [vmem:[#allocation10 + $0x2f0] sm:$0xff]
    %v616 = vld [vmem:[#allocation10 + $0x2f8] sm:$0xff]
    %v617 = vlaneseq
    %v618 = vshrl.u32 %v617, 7
    %v619 = vsub.s32 2, %v618
    %v620 = vrot.slane %v86, %v619
    %621 = vmatprep.subr.mxu0 0.0
    %622 = vmatpush1.msra.mxu0 %v601
    %623 = vmatprep.subr.mxu0 0.0
    %624 = vmatpush1.msra.mxu0 %v602
    %625 = vmatprep.subr.mxu0 0.0
    %626 = vmatpush1.msra.mxu0 %v603
    %627 = vmatprep.subr.mxu0 0.0
    %628 = vmatpush1.msra.mxu0 %v604
    %629 = vmatprep.subr.mxu0 0.0
    %630 = vmatpush1.msra.mxu0 %v605
    %631 = vmatprep.subr.mxu0 0.0
    %632 = vmatpush1.msra.mxu0 %v606
    %633 = vmatprep.subr.mxu0 0.0
    %634 = vmatpush1.msra.mxu0 %v607
    %635 = vmatprep.subr.mxu0 0.0
    %636 = vmatpush1.msra.mxu0 %v608
    %637 = vmatprep.subr.mxu0 0.0
    %638 = vmatpush1.msra.mxu0 %v609
    %639 = vmatprep.subr.mxu0 0.0
    %640 = vmatpush1.msra.mxu0 %v610
    %641 = vmatprep.subr.mxu0 0.0
    %642 = vmatpush1.msra.mxu0 %v611
    %643 = vmatprep.subr.mxu0 0.0
    %644 = vmatpush1.msra.mxu0 %v612
    %645 = vmatprep.subr.mxu0 0.0
    %646 = vmatpush1.msra.mxu0 %v613
    %647 = vmatprep.subr.mxu0 0.0
    %648 = vmatpush1.msra.mxu0 %v614
    %649 = vmatprep.subr.mxu0 0.0
    %650 = vmatpush1.msra.mxu0 %v615
    %651 = vmatprep.subr.mxu0 0.0
    %652 = vmatpush1.msra.mxu0 %v616
    %653 = vmatprep.subr.mxu0 0.0
    %654 = vmatpush1.msra.mxu0 0.0
    %655 = vmatprep.subr.mxu0 0.0
    %656 = vmatpush1.msra.mxu0 0.0
    %657 = vmatprep.subr.mxu0 0.0
    %658 = vmatpush1.msra.mxu0 0.0
    %659 = vmatprep.subr.mxu0 0.0
    %660 = vmatpush1.msra.mxu0 0.0
    %661 = vmatprep.subr.mxu0 0.0
    %662 = vmatpush1.msra.mxu0 0.0
    %663 = vmatprep.subr.mxu0 0.0
    %664 = vmatpush1.msra.mxu0 0.0
    %665 = vmatprep.subr.mxu0 0.0
    %666 = vmatpush1.msra.mxu0 0.0
    %667 = vmatprep.subr.mxu0 0.0
    %668 = vmatpush1.msra.mxu0 0.0
    %669 = vmatprep.subr.mxu0 0.0
    %670 = vmatpush1.msra.mxu0 0.0
    %671 = vmatprep.subr.mxu0 0.0
    %672 = vmatpush1.msra.mxu0 0.0
    %673 = vmatprep.subr.mxu0 0.0
    %674 = vmatpush1.msra.mxu0 0.0
    %675 = vmatprep.subr.mxu0 0.0
    %676 = vmatpush1.msra.mxu0 0.0
    %677 = vmatprep.subr.mxu0 0.0
    %678 = vmatpush1.msra.mxu0 0.0
    %679 = vmatprep.subr.mxu0 0.0
    %680 = vmatpush1.msra.mxu0 0.0
    %681 = vmatprep.subr.mxu0 0.0
    %682 = vmatpush1.msra.mxu0 0.0
    %683 = vmatprep.subr.mxu0 0.0
    %684 = vmatpush1.msra.mxu0 0.0
    %685 = vmatprep.mubr.f32.mxu0 0.0
    %686 = vmatmul.mubr.f32.gmra.mrb[0].mxu0 %v76
    %v687 = vpop.f32.mrb[0].mxu0
    %v688 = vadd.f32 %v620, %v687
    %v689 = vpop.f32.mrb[0].mxu0
    %690 = vmatprep.mubr.f32.mxu0 0.0
    %691 = vmatmul.mubr.f32.gmra.mrb[0].mxu0 %v77
    %v692 = vpop.f32.mrb[0].mxu0
    %v693 = vadd.f32 %v620, %v692
    %v694 = vpop.f32.mrb[0].mxu0
    %695 = vmatprep.mubr.f32.mxu0 0.0
    %696 = vmatmul.mubr.f32.gmra.mrb[0].mxu0 %v78
    %v697 = vpop.f32.mrb[0].mxu0
    %v698 = vadd.f32 %v620, %v697
    %v699 = vpop.f32.mrb[0].mxu0
    %700 = vmatprep.mubr.f32.mxu0 0.0
    %701 = vmatmul.mubr.f32.gmra.mrb[0].mxu0 %v79
    %v702 = vpop.f32.mrb[0].mxu0
    %v703 = vadd.f32 %v620, %v702
    %v704 = vpop.f32.mrb[0].mxu0
    %705 = vmatprep.mubr.f32.mxu0 0.0
    %706 = vmatmul.mubr.f32.gmra.mrb[0].mxu0 %v80
    %v707 = vpop.f32.mrb[0].mxu0
    %v708 = vadd.f32 %v620, %v707
    %v709 = vpop.f32.mrb[0].mxu0
    %710 = vmatprep.mubr.f32.mxu0 0.0
    %711 = vmatmul.mubr.f32.gmra.mrb[0].mxu0 %v81
    %v712 = vpop.f32.mrb[0].mxu0
    %v713 = vadd.f32 %v620, %v712
    %v714 = vpop.f32.mrb[0].mxu0
    %715 = vmatprep.mubr.f32.mxu0 0.0
    %716 = vmatmul.mubr.f32.gmra.mrb[0].mxu0 %v82
    %v717 = vpop.f32.mrb[0].mxu0
    %v718 = vadd.f32 %v620, %v717
    %v719 = vpop.f32.mrb[0].mxu0
    %720 = vmatprep.mubr.f32.mxu0 0.0
    %721 = vmatmul.mubr.f32.gmra.mrb[0].mxu0 %v83
    %v722 = vpop.f32.mrb[0].mxu0
    %v723 = vadd.f32 %v620, %v722
    %v724 = vpop.f32.mrb[0].mxu0
    %725 = vdwg.mxu0
    %726 = vst [vmem:[#allocation2] sm:$0xff] %v688
    %727 = vst [vmem:[#allocation2 + $0x8] sm:$0xff] %v693
    %728 = vst [vmem:[#allocation2 + $0x10] sm:$0xff] %v698
    %729 = vst [vmem:[#allocation2 + $0x18] sm:$0xff] %v703
    %730 = vst [vmem:[#allocation2 + $0x20] sm:$0xff] %v708
    %731 = vst [vmem:[#allocation2 + $0x28] sm:$0xff] %v713
    %732 = vst [vmem:[#allocation2 + $0x30] sm:$0xff] %v718
    %733 = vst [vmem:[#allocation2 + $0x38] sm:$0xff] %v723
    %v734 = vld [vmem:[#allocation10 + $0x300] sm:$0xff]
    %v735 = vld [vmem:[#allocation10 + $0x308] sm:$0xff]
    %v736 = vld [vmem:[#allocation10 + $0x310] sm:$0xff]
    %v737 = vld [vmem:[#allocation10 + $0x318] sm:$0xff]
    %v738 = vld [vmem:[#allocation10 + $0x320] sm:$0xff]
    %v739 = vld [vmem:[#allocation10 + $0x328] sm:$0xff]
    %v740 = vld [vmem:[#allocation10 + $0x330] sm:$0xff]
    %v741 = vld [vmem:[#allocation10 + $0x338] sm:$0xff]
    %v742 = vld [vmem:[#allocation10 + $0x340] sm:$0xff]
    %v743 = vld [vmem:[#allocation10 + $0x348] sm:$0xff]
    %v744 = vld [vmem:[#allocation10 + $0x350] sm:$0xff]
    %v745 = vld [vmem:[#allocation10 + $0x358] sm:$0xff]
    %v746 = vld [vmem:[#allocation10 + $0x360] sm:$0xff]
    %v747 = vld [vmem:[#allocation10 + $0x368] sm:$0xff]
    %v748 = vld [vmem:[#allocation10 + $0x370] sm:$0xff]
    %v749 = vld [vmem:[#allocation10 + $0x378] sm:$0xff]
    %v750 = vlaneseq
    %v751 = vshrl.u32 %v750, 7
    %v752 = vsub.s32 3, %v751
    %v753 = vrot.slane %v86, %v752
    %754 = vmatprep.subr.mxu0 0.0
    %755 = vmatpush1.msra.mxu0 %v734
    %756 = vmatprep.subr.mxu0 0.0
    %757 = vmatpush1.msra.mxu0 %v735
    %758 = vmatprep.subr.mxu0 0.0
    %759 = vmatpush1.msra.mxu0 %v736
    %760 = vmatprep.subr.mxu0 0.0
    %761 = vmatpush1.msra.mxu0 %v737
    %762 = vmatprep.subr.mxu0 0.0
    %763 = vmatpush1.msra.mxu0 %v738
    %764 = vmatprep.subr.mxu0 0.0
    %765 = vmatpush1.msra.mxu0 %v739
    %766 = vmatprep.subr.mxu0 0.0
    %767 = vmatpush1.msra.mxu0 %v740
    %768 = vmatprep.subr.mxu0 0.0
    %769 = vmatpush1.msra.mxu0 %v741
    %770 = vmatprep.subr.mxu0 0.0
    %771 = vmatpush1.msra.mxu0 %v742
    %772 = vmatprep.subr.mxu0 0.0
    %773 = vmatpush1.msra.mxu0 %v743
    %774 = vmatprep.subr.mxu0 0.0
    %775 = vmatpush1.msra.mxu0 %v744
    %776 = vmatprep.subr.mxu0 0.0
    %777 = vmatpush1.msra.mxu0 %v745
    %778 = vmatprep.subr.mxu0 0.0
    %779 = vmatpush1.msra.mxu0 %v746
    %780 = vmatprep.subr.mxu0 0.0
    %781 = vmatpush1.msra.mxu0 %v747
    %782 = vmatprep.subr.mxu0 0.0
    %783 = vmatpush1.msra.mxu0 %v748
    %784 = vmatprep.subr.mxu0 0.0
    %785 = vmatpush1.msra.mxu0 %v749
    %786 = vmatprep.subr.mxu0 0.0
    %787 = vmatpush1.msra.mxu0 0.0
    %788 = vmatprep.subr.mxu0 0.0
    %789 = vmatpush1.msra.mxu0 0.0
    %790 = vmatprep.subr.mxu0 0.0
    %791 = vmatpush1.msra.mxu0 0.0
    %792 = vmatprep.subr.mxu0 0.0
    %793 = vmatpush1.msra.mxu0 0.0
    %794 = vmatprep.subr.mxu0 0.0
    %795 = vmatpush1.msra.mxu0 0.0
    %796 = vmatprep.subr.mxu0 0.0
    %797 = vmatpush1.msra.mxu0 0.0
    %798 = vmatprep.subr.mxu0 0.0
    %799 = vmatpush1.msra.mxu0 0.0
    %800 = vmatprep.subr.mxu0 0.0
    %801 = vmatpush1.msra.mxu0 0.0
    %802 = vmatprep.subr.mxu0 0.0
    %803 = vmatpush1.msra.mxu0 0.0
    %804 = vmatprep.subr.mxu0 0.0
    %805 = vmatpush1.msra.mxu0 0.0
    %806 = vmatprep.subr.mxu0 0.0
    %807 = vmatpush1.msra.mxu0 0.0
    %808 = vmatprep.subr.mxu0 0.0
    %809 = vmatpush1.msra.mxu0 0.0
    %810 = vmatprep.subr.mxu0 0.0
    %811 = vmatpush1.msra.mxu0 0.0
    %812 = vmatprep.subr.mxu0 0.0
    %813 = vmatpush1.msra.mxu0 0.0
    %814 = vmatprep.subr.mxu0 0.0
    %815 = vmatpush1.msra.mxu0 0.0
    %816 = vmatprep.subr.mxu0 0.0
    %817 = vmatpush1.msra.mxu0 0.0
    %818 = vmatprep.mubr.f32.mxu0 0.0
    %819 = vmatmul.mubr.f32.gmra.mrb[0].mxu0 %v76
    %v820 = vpop.f32.mrb[0].mxu0
    %v821 = vadd.f32 %v753, %v820
    %v822 = vpop.f32.mrb[0].mxu0
    %823 = vmatprep.mubr.f32.mxu0 0.0
    %824 = vmatmul.mubr.f32.gmra.mrb[0].mxu0 %v77
    %v825 = vpop.f32.mrb[0].mxu0
    %v826 = vadd.f32 %v753, %v825
    %v827 = vpop.f32.mrb[0].mxu0
    %828 = vmatprep.mubr.f32.mxu0 0.0
    %829 = vmatmul.mubr.f32.gmra.mrb[0].mxu0 %v78
    %v830 = vpop.f32.mrb[0].mxu0
    %v831 = vadd.f32 %v753, %v830
    %v832 = vpop.f32.mrb[0].mxu0
    %833 = vmatprep.mubr.f32.mxu0 0.0
    %834 = vmatmul.mubr.f32.gmra.mrb[0].mxu0 %v79
    %v835 = vpop.f32.mrb[0].mxu0
    %v836 = vadd.f32 %v753, %v835
    %v837 = vpop.f32.mrb[0].mxu0
    %838 = vmatprep.mubr.f32.mxu0 0.0
    %839 = vmatmul.mubr.f32.gmra.mrb[0].mxu0 %v80
    %v840 = vpop.f32.mrb[0].mxu0
    %v841 = vadd.f32 %v753, %v840
    %v842 = vpop.f32.mrb[0].mxu0
    %843 = vmatprep.mubr.f32.mxu0 0.0
    %844 = vmatmul.mubr.f32.gmra.mrb[0].mxu0 %v81
    %v845 = vpop.f32.mrb[0].mxu0
    %v846 = vadd.f32 %v753, %v845
    %v847 = vpop.f32.mrb[0].mxu0
    %848 = vmatprep.mubr.f32.mxu0 0.0
    %849 = vmatmul.mubr.f32.gmra.mrb[0].mxu0 %v82
    %v850 = vpop.f32.mrb[0].mxu0
    %v851 = vadd.f32 %v753, %v850
    %v852 = vpop.f32.mrb[0].mxu0
    %853 = vmatprep.mubr.f32.mxu0 0.0
    %854 = vmatmul.mubr.f32.gmra.mrb[0].mxu0 %v83
    %v855 = vpop.f32.mrb[0].mxu0
    %v856 = vadd.f32 %v753, %v855
    %v857 = vpop.f32.mrb[0].mxu0
    %858 = vdwg.mxu0
    %859 = vst [vmem:[#allocation3] sm:$0xff] %v821
    %860 = vst [vmem:[#allocation3 + $0x8] sm:$0xff] %v826
    %861 = vst [vmem:[#allocation3 + $0x10] sm:$0xff] %v831
    %862 = vst [vmem:[#allocation3 + $0x18] sm:$0xff] %v836
    %863 = vst [vmem:[#allocation3 + $0x20] sm:$0xff] %v841
    %864 = vst [vmem:[#allocation3 + $0x28] sm:$0xff] %v846
    %865 = vst [vmem:[#allocation3 + $0x30] sm:$0xff] %v851
    %866 = vst [vmem:[#allocation3 + $0x38] sm:$0xff] %v856
    %v867 = vld [vmem:[#allocation11] sm:$0xff]
    %v868 = vld [vmem:[#allocation11 + $0x8] sm:$0xff]
    %v869 = vld [vmem:[#allocation11 + $0x10] sm:$0xff]
    %v870 = vld [vmem:[#allocation11 + $0x18] sm:$0xff]
    %v871 = vld [vmem:[#allocation11 + $0x20] sm:$0xff]
    %v872 = vld [vmem:[#allocation11 + $0x28] sm:$0xff]
    %v873 = vld [vmem:[#allocation11 + $0x30] sm:$0xff]
    %v874 = vld [vmem:[#allocation11 + $0x38] sm:$0xff]
    %v875 = vld [vmem:[#allocation11 + $0x40] sm:$0xff]
    %v876 = vld [vmem:[#allocation11 + $0x48] sm:$0xff]
    %v877 = vld [vmem:[#allocation11 + $0x50] sm:$0xff]
    %v878 = vld [vmem:[#allocation11 + $0x58] sm:$0xff]
    %v879 = vld [vmem:[#allocation11 + $0x60] sm:$0xff]
    %v880 = vld [vmem:[#allocation11 + $0x68] sm:$0xff]
    %v881 = vld [vmem:[#allocation11 + $0x70] sm:$0xff]
    %v882 = vld [vmem:[#allocation11 + $0x78] sm:$0xff]
    %v883 = vld [vmem:[#allocation11 + $0x80] sm:$0xff]
    %v884 = vld [vmem:[#allocation11 + $0x88] sm:$0xff]
    %v885 = vld [vmem:[#allocation11 + $0x90] sm:$0xff]
    %v886 = vld [vmem:[#allocation11 + $0x98] sm:$0xff]
    %v887 = vld [vmem:[#allocation11 + $0xa0] sm:$0xff]
    %v888 = vld [vmem:[#allocation11 + $0xa8] sm:$0xff]
    %v889 = vld [vmem:[#allocation11 + $0xb0] sm:$0xff]
    %v890 = vld [vmem:[#allocation11 + $0xb8] sm:$0xff]
    %v891 = vld [vmem:[#allocation11 + $0xc0] sm:$0xff]
    %v892 = vld [vmem:[#allocation11 + $0xc8] sm:$0xff]
    %v893 = vld [vmem:[#allocation11 + $0xd0] sm:$0xff]
    %v894 = vld [vmem:[#allocation11 + $0xd8] sm:$0xff]
    %v895 = vld [vmem:[#allocation11 + $0xe0] sm:$0xff]
    %v896 = vld [vmem:[#allocation11 + $0xe8] sm:$0xff]
    %v897 = vld [vmem:[#allocation11 + $0xf0] sm:$0xff]
    %v898 = vld [vmem:[#allocation11 + $0xf8] sm:$0xff]
    %v899 = vld [vmem:[#allocation2] sm:$0xff]
    %v900 = vld [vmem:[#allocation3] sm:$0xff]
    %v901 = vld [vmem:[#allocation4] sm:$0xff]
    %902 = vmatprep.subr.mxu0 %v868
    %903 = vmatpush1.msra.mxu0 %v867
    %904 = vmatprep.subr.mxu0 %v870
    %905 = vmatpush1.msra.mxu0 %v869
    %906 = vmatprep.subr.mxu0 %v872
    %907 = vmatpush1.msra.mxu0 %v871
    %908 = vmatprep.subr.mxu0 %v874
    %909 = vmatpush1.msra.mxu0 %v873
    %910 = vmatprep.subr.mxu0 %v876
    %911 = vmatpush1.msra.mxu0 %v875
    %912 = vmatprep.subr.mxu0 %v878
    %913 = vmatpush1.msra.mxu0 %v877
    %914 = vmatprep.subr.mxu0 %v880
    %915 = vmatpush1.msra.mxu0 %v879
    %916 = vmatprep.subr.mxu0 %v882
    %917 = vmatpush1.msra.mxu0 %v881
    %918 = vmatprep.subr.mxu0 %v884
    %919 = vmatpush1.msra.mxu0 %v883
    %920 = vmatprep.subr.mxu0 %v886
    %921 = vmatpush1.msra.mxu0 %v885
    %922 = vmatprep.subr.mxu0 %v888
    %923 = vmatpush1.msra.mxu0 %v887
    %924 = vmatprep.subr.mxu0 %v890
    %925 = vmatpush1.msra.mxu0 %v889
    %926 = vmatprep.subr.mxu0 %v892
    %927 = vmatpush1.msra.mxu0 %v891
    %928 = vmatprep.subr.mxu0 %v894
    %929 = vmatpush1.msra.mxu0 %v893
    %930 = vmatprep.subr.mxu0 %v896
    %931 = vmatpush1.msra.mxu0 %v895
    %932 = vmatprep.subr.mxu0 %v898
    %933 = vmatpush1.msra.mxu0 %v897
    %934 = vmatprep.subr.mxu0 0.0
    %935 = vmatpush1.msra.mxu0 0.0
    %936 = vmatprep.subr.mxu0 0.0
    %937 = vmatpush1.msra.mxu0 0.0
    %938 = vmatprep.subr.mxu0 0.0
    %939 = vmatpush1.msra.mxu0 0.0
    %940 = vmatprep.subr.mxu0 0.0
    %941 = vmatpush1.msra.mxu0 0.0
    %942 = vmatprep.subr.mxu0 0.0
    %943 = vmatpush1.msra.mxu0 0.0
    %944 = vmatprep.subr.mxu0 0.0
    %945 = vmatpush1.msra.mxu0 0.0
    %946 = vmatprep.subr.mxu0 0.0
    %947 = vmatpush1.msra.mxu0 0.0
    %948 = vmatprep.subr.mxu0 0.0
    %949 = vmatpush1.msra.mxu0 0.0
    %950 = vmatprep.subr.mxu0 0.0
    %951 = vmatpush1.msra.mxu0 0.0
    %952 = vmatprep.subr.mxu0 0.0
    %953 = vmatpush1.msra.mxu0 0.0
    %954 = vmatprep.subr.mxu0 0.0
    %955 = vmatpush1.msra.mxu0 0.0
    %956 = vmatprep.subr.mxu0 0.0
    %957 = vmatpush1.msra.mxu0 0.0
    %958 = vmatprep.subr.mxu0 0.0
    %959 = vmatpush1.msra.mxu0 0.0
    %960 = vmatprep.subr.mxu0 0.0
    %961 = vmatpush1.msra.mxu0 0.0
    %962 = vmatprep.subr.mxu0 0.0
    %963 = vmatpush1.msra.mxu0 0.0
    %964 = vmatprep.subr.mxu0 0.0
    %965 = vmatpush1.msra.mxu0 0.0
    %966 = vmatprep.mubr.f32.mxu0 0.0
    %967 = vmatmul.mubr.f32.gmra.mrb[0].mxu0 0.0
    %v968 = vpop.f32.mrb[0].mxu0
    %v969 = vadd.f32 0.0, %v968
    %v970 = vpop.f32.mrb[0].mxu0
    %v971 = vadd.f32 0.0, %v970
    %972 = vdwg.mxu0
    %v973 = vadd.f32 %v899, %v969
    %v974 = vxor.u32 %v973, 2147483648
    %v975 = vmul.f32 %v974, 1.442695
    %v976 = vpow.pop %v975
    %v977 = vadd.f32 %v976, 1.0
    %v978 = vrcp.pop %v977
    %v979 = vmul.f32 1.0, %v978
    %v980 = vlaneseq
    %v981 = vshrl.u32 %v980, 7
    %v982 = vsub.s32 4, %v981
    %v983 = vrot.slane %v86, %v982
    %v984 = vadd.f32 %v971, %v983
    %v985 = vmul.f32 %v979, %v984
    %v986 = vadd.f32 %v900, %v985
    %v987 = vtanh.pop %v986
    %v988 = vmul.f32 %v901, %v987
    %v989 = vsub.f32 1.0, %v901
    %v990 = vmul.f32 %v989, 0.0
    %v991 = vadd.f32 %v988, %v990
    %s992 = scalar_lea.vmem [#allocation2], 8
    %v993 = vld [vmem:[%s992] sm:$0xff]
    %s994 = scalar_lea.vmem [#allocation3], 8
    %v995 = vld [vmem:[%s994] sm:$0xff]
    %s996 = scalar_lea.vmem [#allocation4], 8
    %v997 = vld [vmem:[%s996] sm:$0xff]
    %998 = vmatprep.subr.mxu0 %v868
    %999 = vmatpush1.msra.mxu0 %v867
    %1000 = vmatprep.subr.mxu0 %v870
    %1001 = vmatpush1.msra.mxu0 %v869
    %1002 = vmatprep.subr.mxu0 %v872
    %1003 = vmatpush1.msra.mxu0 %v871
    %1004 = vmatprep.subr.mxu0 %v874
    %1005 = vmatpush1.msra.mxu0 %v873
    %1006 = vmatprep.subr.mxu0 %v876
    %1007 = vmatpush1.msra.mxu0 %v875
    %1008 = vmatprep.subr.mxu0 %v878
    %1009 = vmatpush1.msra.mxu0 %v877
    %1010 = vmatprep.subr.mxu0 %v880
    %1011 = vmatpush1.msra.mxu0 %v879
    %1012 = vmatprep.subr.mxu0 %v882
    %1013 = vmatpush1.msra.mxu0 %v881
    %1014 = vmatprep.subr.mxu0 %v884
    %1015 = vmatpush1.msra.mxu0 %v883
    %1016 = vmatprep.subr.mxu0 %v886
    %1017 = vmatpush1.msra.mxu0 %v885
    %1018 = vmatprep.subr.mxu0 %v888
    %1019 = vmatpush1.msra.mxu0 %v887
    %1020 = vmatprep.subr.mxu0 %v890
    %1021 = vmatpush1.msra.mxu0 %v889
    %1022 = vmatprep.subr.mxu0 %v892
    %1023 = vmatpush1.msra.mxu0 %v891
    %1024 = vmatprep.subr.mxu0 %v894
    %1025 = vmatpush1.msra.mxu0 %v893
    %1026 = vmatprep.subr.mxu0 %v896
    %1027 = vmatpush1.msra.mxu0 %v895
    %1028 = vmatprep.subr.mxu0 %v898
    %1029 = vmatpush1.msra.mxu0 %v897
    %1030 = vmatprep.subr.mxu0 0.0
    %1031 = vmatpush1.msra.mxu0 0.0
    %1032 = vmatprep.subr.mxu0 0.0
    %1033 = vmatpush1.msra.mxu0 0.0
    %1034 = vmatprep.subr.mxu0 0.0
    %1035 = vmatpush1.msra.mxu0 0.0
    %1036 = vmatprep.subr.mxu0 0.0
    %1037 = vmatpush1.msra.mxu0 0.0
    %1038 = vmatprep.subr.mxu0 0.0
    %1039 = vmatpush1.msra.mxu0 0.0
    %1040 = vmatprep.subr.mxu0 0.0
    %1041 = vmatpush1.msra.mxu0 0.0
    %1042 = vmatprep.subr.mxu0 0.0
    %1043 = vmatpush1.msra.mxu0 0.0
    %1044 = vmatprep.subr.mxu0 0.0
    %1045 = vmatpush1.msra.mxu0 0.0
    %1046 = vmatprep.subr.mxu0 0.0
    %1047 = vmatpush1.msra.mxu0 0.0
    %1048 = vmatprep.subr.mxu0 0.0
    %1049 = vmatpush1.msra.mxu0 0.0
    %1050 = vmatprep.subr.mxu0 0.0
    %1051 = vmatpush1.msra.mxu0 0.0
    %1052 = vmatprep.subr.mxu0 0.0
    %1053 = vmatpush1.msra.mxu0 0.0
    %1054 = vmatprep.subr.mxu0 0.0
    %1055 = vmatpush1.msra.mxu0 0.0
    %1056 = vmatprep.subr.mxu0 0.0
    %1057 = vmatpush1.msra.mxu0 0.0
    %1058 = vmatprep.subr.mxu0 0.0
    %1059 = vmatpush1.msra.mxu0 0.0
    %1060 = vmatprep.subr.mxu0 0.0
    %1061 = vmatpush1.msra.mxu0 0.0
    %1062 = vmatprep.mubr.f32.mxu0 0.0
    %1063 = vmatmul.mubr.f32.gmra.mrb[0].mxu0 %v991
    %v1064 = vpop.f32.mrb[0].mxu0
    %v1065 = vadd.f32 0.0, %v1064
    %v1066 = vpop.f32.mrb[0].mxu0
    %v1067 = vadd.f32 0.0, %v1066
    %1068 = vdwg.mxu0
    %v1069 = vadd.f32 %v993, %v1065
    %v1070 = vxor.u32 %v1069, 2147483648
    %v1071 = vmul.f32 %v1070, 1.442695
    %v1072 = vpow.pop %v1071
    %v1073 = vadd.f32 %v1072, 1.0
    %v1074 = vrcp.pop %v1073
    %v1075 = vmul.f32 1.0, %v1074
    %v1076 = vadd.f32 %v1067, %v983
    %v1077 = vmul.f32 %v1075, %v1076
    %v1078 = vadd.f32 %v995, %v1077
    %v1079 = vtanh.pop %v1078
    %v1080 = vmul.f32 %v997, %v1079
    %v1081 = vsub.f32 1.0, %v997
    %v1082 = vmul.f32 %v1081, %v991
    %v1083 = vadd.f32 %v1080, %v1082
    %s1084 = scalar_lea.vmem [#allocation2], 16
    %v1085 = vld [vmem:[%s1084] sm:$0xff]
    %s1086 = scalar_lea.vmem [#allocation3], 16
    %v1087 = vld [vmem:[%s1086] sm:$0xff]
    %s1088 = scalar_lea.vmem [#allocation4], 16
    %v1089 = vld [vmem:[%s1088] sm:$0xff]
    %1090 = vmatprep.subr.mxu0 %v868
    %1091 = vmatpush1.msra.mxu0 %v867
    %1092 = vmatprep.subr.mxu0 %v870
    %1093 = vmatpush1.msra.mxu0 %v869
    %1094 = vmatprep.subr.mxu0 %v872
    %1095 = vmatpush1.msra.mxu0 %v871
    %1096 = vmatprep.subr.mxu0 %v874
    %1097 = vmatpush1.msra.mxu0 %v873
    %1098 = vmatprep.subr.mxu0 %v876
    %1099 = vmatpush1.msra.mxu0 %v875
    %1100 = vmatprep.subr.mxu0 %v878
    %1101 = vmatpush1.msra.mxu0 %v877
    %1102 = vmatprep.subr.mxu0 %v880
    %1103 = vmatpush1.msra.mxu0 %v879
    %1104 = vmatprep.subr.mxu0 %v882
    %1105 = vmatpush1.msra.mxu0 %v881
    %1106 = vmatprep.subr.mxu0 %v884
    %1107 = vmatpush1.msra.mxu0 %v883
    %1108 = vmatprep.subr.mxu0 %v886
    %1109 = vmatpush1.msra.mxu0 %v885
    %1110 = vmatprep.subr.mxu0 %v888
    %1111 = vmatpush1.msra.mxu0 %v887
    %1112 = vmatprep.subr.mxu0 %v890
    %1113 = vmatpush1.msra.mxu0 %v889
    %1114 = vmatprep.subr.mxu0 %v892
    %1115 = vmatpush1.msra.mxu0 %v891
    %1116 = vmatprep.subr.mxu0 %v894
    %1117 = vmatpush1.msra.mxu0 %v893
    %1118 = vmatprep.subr.mxu0 %v896
    %1119 = vmatpush1.msra.mxu0 %v895
    %1120 = vmatprep.subr.mxu0 %v898
    %1121 = vmatpush1.msra.mxu0 %v897
    %1122 = vmatprep.subr.mxu0 0.0
    %1123 = vmatpush1.msra.mxu0 0.0
    %1124 = vmatprep.subr.mxu0 0.0
    %1125 = vmatpush1.msra.mxu0 0.0
    %1126 = vmatprep.subr.mxu0 0.0
    %1127 = vmatpush1.msra.mxu0 0.0
    %1128 = vmatprep.subr.mxu0 0.0
    %1129 = vmatpush1.msra.mxu0 0.0
    %1130 = vmatprep.subr.mxu0 0.0
    %1131 = vmatpush1.msra.mxu0 0.0
    %1132 = vmatprep.subr.mxu0 0.0
    %1133 = vmatpush1.msra.mxu0 0.0
    %1134 = vmatprep.subr.mxu0 0.0
    %1135 = vmatpush1.msra.mxu0 0.0
    %1136 = vmatprep.subr.mxu0 0.0
    %1137 = vmatpush1.msra.mxu0 0.0
    %1138 = vmatprep.subr.mxu0 0.0
    %1139 = vmatpush1.msra.mxu0 0.0
    %1140 = vmatprep.subr.mxu0 0.0
    %1141 = vmatpush1.msra.mxu0 0.0
    %1142 = vmatprep.subr.mxu0 0.0
    %1143 = vmatpush1.msra.mxu0 0.0
    %1144 = vmatprep.subr.mxu0 0.0
    %1145 = vmatpush1.msra.mxu0 0.0
    %1146 = vmatprep.subr.mxu0 0.0
    %1147 = vmatpush1.msra.mxu0 0.0
    %1148 = vmatprep.subr.mxu0 0.0
    %1149 = vmatpush1.msra.mxu0 0.0
    %1150 = vmatprep.subr.mxu0 0.0
    %1151 = vmatpush1.msra.mxu0 0.0
    %1152 = vmatprep.subr.mxu0 0.0
    %1153 = vmatpush1.msra.mxu0 0.0
    %1154 = vmatprep.mubr.f32.mxu0 0.0
    %1155 = vmatmul.mubr.f32.gmra.mrb[0].mxu0 %v1083
    %v1156 = vpop.f32.mrb[0].mxu0
    %v1157 = vadd.f32 0.0, %v1156
    %v1158 = vpop.f32.mrb[0].mxu0
    %v1159 = vadd.f32 0.0, %v1158
    %1160 = vdwg.mxu0
    %v1161 = vadd.f32 %v1085, %v1157
    %v1162 = vxor.u32 %v1161, 2147483648
    %v1163 = vmul.f32 %v1162, 1.442695
    %v1164 = vpow.pop %v1163
    %v1165 = vadd.f32 %v1164, 1.0
    %v1166 = vrcp.pop %v1165
    %v1167 = vmul.f32 1.0, %v1166
    %v1168 = vadd.f32 %v1159, %v983
    %v1169 = vmul.f32 %v1167, %v1168
    %v1170 = vadd.f32 %v1087, %v1169
    %v1171 = vtanh.pop %v1170
    %v1172 = vmul.f32 %v1089, %v1171
    %v1173 = vsub.f32 1.0, %v1089
    %v1174 = vmul.f32 %v1173, %v1083
    %v1175 = vadd.f32 %v1172, %v1174
    %s1176 = scalar_lea.vmem [#allocation2], 24
    %v1177 = vld [vmem:[%s1176] sm:$0xff]
    %s1178 = scalar_lea.vmem [#allocation3], 24
    %v1179 = vld [vmem:[%s1178] sm:$0xff]
    %s1180 = scalar_lea.vmem [#allocation4], 24
    %v1181 = vld [vmem:[%s1180] sm:$0xff]
    %1182 = vmatprep.subr.mxu0 %v868
    %1183 = vmatpush1.msra.mxu0 %v867
    %1184 = vmatprep.subr.mxu0 %v870
    %1185 = vmatpush1.msra.mxu0 %v869
    %1186 = vmatprep.subr.mxu0 %v872
    %1187 = vmatpush1.msra.mxu0 %v871
    %1188 = vmatprep.subr.mxu0 %v874
    %1189 = vmatpush1.msra.mxu0 %v873
    %1190 = vmatprep.subr.mxu0 %v876
    %1191 = vmatpush1.msra.mxu0 %v875
    %1192 = vmatprep.subr.mxu0 %v878
    %1193 = vmatpush1.msra.mxu0 %v877
    %1194 = vmatprep.subr.mxu0 %v880
    %1195 = vmatpush1.msra.mxu0 %v879
    %1196 = vmatprep.subr.mxu0 %v882
    %1197 = vmatpush1.msra.mxu0 %v881
    %1198 = vmatprep.subr.mxu0 %v884
    %1199 = vmatpush1.msra.mxu0 %v883
    %1200 = vmatprep.subr.mxu0 %v886
    %1201 = vmatpush1.msra.mxu0 %v885
    %1202 = vmatprep.subr.mxu0 %v888
    %1203 = vmatpush1.msra.mxu0 %v887
    %1204 = vmatprep.subr.mxu0 %v890
    %1205 = vmatpush1.msra.mxu0 %v889
    %1206 = vmatprep.subr.mxu0 %v892
    %1207 = vmatpush1.msra.mxu0 %v891
    %1208 = vmatprep.subr.mxu0 %v894
    %1209 = vmatpush1.msra.mxu0 %v893
    %1210 = vmatprep.subr.mxu0 %v896
    %1211 = vmatpush1.msra.mxu0 %v895
    %1212 = vmatprep.subr.mxu0 %v898
    %1213 = vmatpush1.msra.mxu0 %v897
    %1214 = vmatprep.subr.mxu0 0.0
    %1215 = vmatpush1.msra.mxu0 0.0
    %1216 = vmatprep.subr.mxu0 0.0
    %1217 = vmatpush1.msra.mxu0 0.0
    %1218 = vmatprep.subr.mxu0 0.0
    %1219 = vmatpush1.msra.mxu0 0.0
    %1220 = vmatprep.subr.mxu0 0.0
    %1221 = vmatpush1.msra.mxu0 0.0
    %1222 = vmatprep.subr.mxu0 0.0
    %1223 = vmatpush1.msra.mxu0 0.0
    %1224 = vmatprep.subr.mxu0 0.0
    %1225 = vmatpush1.msra.mxu0 0.0
    %1226 = vmatprep.subr.mxu0 0.0
    %1227 = vmatpush1.msra.mxu0 0.0
    %1228 = vmatprep.subr.mxu0 0.0
    %1229 = vmatpush1.msra.mxu0 0.0
    %1230 = vmatprep.subr.mxu0 0.0
    %1231 = vmatpush1.msra.mxu0 0.0
    %1232 = vmatprep.subr.mxu0 0.0
    %1233 = vmatpush1.msra.mxu0 0.0
    %1234 = vmatprep.subr.mxu0 0.0
    %1235 = vmatpush1.msra.mxu0 0.0
    %1236 = vmatprep.subr.mxu0 0.0
    %1237 = vmatpush1.msra.mxu0 0.0
    %1238 = vmatprep.subr.mxu0 0.0
    %1239 = vmatpush1.msra.mxu0 0.0
    %1240 = vmatprep.subr.mxu0 0.0
    %1241 = vmatpush1.msra.mxu0 0.0
    %1242 = vmatprep.subr.mxu0 0.0
    %1243 = vmatpush1.msra.mxu0 0.0
    %1244 = vmatprep.subr.mxu0 0.0
    %1245 = vmatpush1.msra.mxu0 0.0
    %1246 = vmatprep.mubr.f32.mxu0 0.0
    %1247 = vmatmul.mubr.f32.gmra.mrb[0].mxu0 %v1175
    %v1248 = vpop.f32.mrb[0].mxu0
    %v1249 = vadd.f32 0.0, %v1248
    %v1250 = vpop.f32.mrb[0].mxu0
    %v1251 = vadd.f32 0.0, %v1250
    %1252 = vdwg.mxu0
    %v1253 = vadd.f32 %v1177, %v1249
    %v1254 = vxor.u32 %v1253, 2147483648
    %v1255 = vmul.f32 %v1254, 1.442695
    %v1256 = vpow.pop %v1255
    %v1257 = vadd.f32 %v1256, 1.0
    %v1258 = vrcp.pop %v1257
    %v1259 = vmul.f32 1.0, %v1258
    %v1260 = vadd.f32 %v1251, %v983
    %v1261 = vmul.f32 %v1259, %v1260
    %v1262 = vadd.f32 %v1179, %v1261
    %v1263 = vtanh.pop %v1262
    %v1264 = vmul.f32 %v1181, %v1263
    %v1265 = vsub.f32 1.0, %v1181
    %v1266 = vmul.f32 %v1265, %v1175
    %v1267 = vadd.f32 %v1264, %v1266
    %s1268 = scalar_lea.vmem [#allocation2], 32
    %v1269 = vld [vmem:[%s1268] sm:$0xff]
    %s1270 = scalar_lea.vmem [#allocation3], 32
    %v1271 = vld [vmem:[%s1270] sm:$0xff]
    %s1272 = scalar_lea.vmem [#allocation4], 32
    %v1273 = vld [vmem:[%s1272] sm:$0xff]
    %1274 = vmatprep.subr.mxu0 %v868
    %1275 = vmatpush1.msra.mxu0 %v867
    %1276 = vmatprep.subr.mxu0 %v870
    %1277 = vmatpush1.msra.mxu0 %v869
    %1278 = vmatprep.subr.mxu0 %v872
    %1279 = vmatpush1.msra.mxu0 %v871
    %1280 = vmatprep.subr.mxu0 %v874
    %1281 = vmatpush1.msra.mxu0 %v873
    %1282 = vmatprep.subr.mxu0 %v876
    %1283 = vmatpush1.msra.mxu0 %v875
    %1284 = vmatprep.subr.mxu0 %v878
    %1285 = vmatpush1.msra.mxu0 %v877
    %1286 = vmatprep.subr.mxu0 %v880
    %1287 = vmatpush1.msra.mxu0 %v879
    %1288 = vmatprep.subr.mxu0 %v882
    %1289 = vmatpush1.msra.mxu0 %v881
    %1290 = vmatprep.subr.mxu0 %v884
    %1291 = vmatpush1.msra.mxu0 %v883
    %1292 = vmatprep.subr.mxu0 %v886
    %1293 = vmatpush1.msra.mxu0 %v885
    %1294 = vmatprep.subr.mxu0 %v888
    %1295 = vmatpush1.msra.mxu0 %v887
    %1296 = vmatprep.subr.mxu0 %v890
    %1297 = vmatpush1.msra.mxu0 %v889
    %1298 = vmatprep.subr.mxu0 %v892
    %1299 = vmatpush1.msra.mxu0 %v891
    %1300 = vmatprep.subr.mxu0 %v894
    %1301 = vmatpush1.msra.mxu0 %v893
    %1302 = vmatprep.subr.mxu0 %v896
    %1303 = vmatpush1.msra.mxu0 %v895
    %1304 = vmatprep.subr.mxu0 %v898
    %1305 = vmatpush1.msra.mxu0 %v897
    %1306 = vmatprep.subr.mxu0 0.0
    %1307 = vmatpush1.msra.mxu0 0.0
    %1308 = vmatprep.subr.mxu0 0.0
    %1309 = vmatpush1.msra.mxu0 0.0
    %1310 = vmatprep.subr.mxu0 0.0
    %1311 = vmatpush1.msra.mxu0 0.0
    %1312 = vmatprep.subr.mxu0 0.0
    %1313 = vmatpush1.msra.mxu0 0.0
    %1314 = vmatprep.subr.mxu0 0.0
    %1315 = vmatpush1.msra.mxu0 0.0
    %1316 = vmatprep.subr.mxu0 0.0
    %1317 = vmatpush1.msra.mxu0 0.0
    %1318 = vmatprep.subr.mxu0 0.0
    %1319 = vmatpush1.msra.mxu0 0.0
    %1320 = vmatprep.subr.mxu0 0.0
    %1321 = vmatpush1.msra.mxu0 0.0
    %1322 = vmatprep.subr.mxu0 0.0
    %1323 = vmatpush1.msra.mxu0 0.0
    %1324 = vmatprep.subr.mxu0 0.0
    %1325 = vmatpush1.msra.mxu0 0.0
    %1326 = vmatprep.subr.mxu0 0.0
    %1327 = vmatpush1.msra.mxu0 0.0
    %1328 = vmatprep.subr.mxu0 0.0
    %1329 = vmatpush1.msra.mxu0 0.0
    %1330 = vmatprep.subr.mxu0 0.0
    %1331 = vmatpush1.msra.mxu0 0.0
    %1332 = vmatprep.subr.mxu0 0.0
    %1333 = vmatpush1.msra.mxu0 0.0
    %1334 = vmatprep.subr.mxu0 0.0
    %1335 = vmatpush1.msra.mxu0 0.0
    %1336 = vmatprep.subr.mxu0 0.0
    %1337 = vmatpush1.msra.mxu0 0.0
    %1338 = vmatprep.mubr.f32.mxu0 0.0
    %1339 = vmatmul.mubr.f32.gmra.mrb[0].mxu0 %v1267
    %v1340 = vpop.f32.mrb[0].mxu0
    %v1341 = vadd.f32 0.0, %v1340
    %v1342 = vpop.f32.mrb[0].mxu0
    %v1343 = vadd.f32 0.0, %v1342
    %1344 = vdwg.mxu0
    %v1345 = vadd.f32 %v1269, %v1341
    %v1346 = vxor.u32 %v1345, 2147483648
    %v1347 = vmul.f32 %v1346, 1.442695
    %v1348 = vpow.pop %v1347
    %v1349 = vadd.f32 %v1348, 1.0
    %v1350 = vrcp.pop %v1349
    %v1351 = vmul.f32 1.0, %v1350
    %v1352 = vadd.f32 %v1343, %v983
    %v1353 = vmul.f32 %v1351, %v1352
    %v1354 = vadd.f32 %v1271, %v1353
    %v1355 = vtanh.pop %v1354
    %v1356 = vmul.f32 %v1273, %v1355
    %v1357 = vsub.f32 1.0, %v1273
    %v1358 = vmul.f32 %v1357, %v1267
    %v1359 = vadd.f32 %v1356, %v1358
    %s1360 = scalar_lea.vmem [#allocation2], 40
    %v1361 = vld [vmem:[%s1360] sm:$0xff]
    %s1362 = scalar_lea.vmem [#allocation3], 40
    %v1363 = vld [vmem:[%s1362] sm:$0xff]
    %s1364 = scalar_lea.vmem [#allocation4], 40
    %v1365 = vld [vmem:[%s1364] sm:$0xff]
    %1366 = vmatprep.subr.mxu0 %v868
    %1367 = vmatpush1.msra.mxu0 %v867
    %1368 = vmatprep.subr.mxu0 %v870
    %1369 = vmatpush1.msra.mxu0 %v869
    %1370 = vmatprep.subr.mxu0 %v872
    %1371 = vmatpush1.msra.mxu0 %v871
    %1372 = vmatprep.subr.mxu0 %v874
    %1373 = vmatpush1.msra.mxu0 %v873
    %1374 = vmatprep.subr.mxu0 %v876
    %1375 = vmatpush1.msra.mxu0 %v875
    %1376 = vmatprep.subr.mxu0 %v878
    %1377 = vmatpush1.msra.mxu0 %v877
    %1378 = vmatprep.subr.mxu0 %v880
    %1379 = vmatpush1.msra.mxu0 %v879
    %1380 = vmatprep.subr.mxu0 %v882
    %1381 = vmatpush1.msra.mxu0 %v881
    %1382 = vmatprep.subr.mxu0 %v884
    %1383 = vmatpush1.msra.mxu0 %v883
    %1384 = vmatprep.subr.mxu0 %v886
    %1385 = vmatpush1.msra.mxu0 %v885
    %1386 = vmatprep.subr.mxu0 %v888
    %1387 = vmatpush1.msra.mxu0 %v887
    %1388 = vmatprep.subr.mxu0 %v890
    %1389 = vmatpush1.msra.mxu0 %v889
    %1390 = vmatprep.subr.mxu0 %v892
    %1391 = vmatpush1.msra.mxu0 %v891
    %1392 = vmatprep.subr.mxu0 %v894
    %1393 = vmatpush1.msra.mxu0 %v893
    %1394 = vmatprep.subr.mxu0 %v896
    %1395 = vmatpush1.msra.mxu0 %v895
    %1396 = vmatprep.subr.mxu0 %v898
    %1397 = vmatpush1.msra.mxu0 %v897
    %1398 = vmatprep.subr.mxu0 0.0
    %1399 = vmatpush1.msra.mxu0 0.0
    %1400 = vmatprep.subr.mxu0 0.0
    %1401 = vmatpush1.msra.mxu0 0.0
    %1402 = vmatprep.subr.mxu0 0.0
    %1403 = vmatpush1.msra.mxu0 0.0
    %1404 = vmatprep.subr.mxu0 0.0
    %1405 = vmatpush1.msra.mxu0 0.0
    %1406 = vmatprep.subr.mxu0 0.0
    %1407 = vmatpush1.msra.mxu0 0.0
    %1408 = vmatprep.subr.mxu0 0.0
    %1409 = vmatpush1.msra.mxu0 0.0
    %1410 = vmatprep.subr.mxu0 0.0
    %1411 = vmatpush1.msra.mxu0 0.0
    %1412 = vmatprep.subr.mxu0 0.0
    %1413 = vmatpush1.msra.mxu0 0.0
    %1414 = vmatprep.subr.mxu0 0.0
    %1415 = vmatpush1.msra.mxu0 0.0
    %1416 = vmatprep.subr.mxu0 0.0
    %1417 = vmatpush1.msra.mxu0 0.0
    %1418 = vmatprep.subr.mxu0 0.0
    %1419 = vmatpush1.msra.mxu0 0.0
    %1420 = vmatprep.subr.mxu0 0.0
    %1421 = vmatpush1.msra.mxu0 0.0
    %1422 = vmatprep.subr.mxu0 0.0
    %1423 = vmatpush1.msra.mxu0 0.0
    %1424 = vmatprep.subr.mxu0 0.0
    %1425 = vmatpush1.msra.mxu0 0.0
    %1426 = vmatprep.subr.mxu0 0.0
    %1427 = vmatpush1.msra.mxu0 0.0
    %1428 = vmatprep.subr.mxu0 0.0
    %1429 = vmatpush1.msra.mxu0 0.0
    %1430 = vmatprep.mubr.f32.mxu0 0.0
    %1431 = vmatmul.mubr.f32.gmra.mrb[0].mxu0 %v1359
    %v1432 = vpop.f32.mrb[0].mxu0
    %v1433 = vadd.f32 0.0, %v1432
    %v1434 = vpop.f32.mrb[0].mxu0
    %v1435 = vadd.f32 0.0, %v1434
    %1436 = vdwg.mxu0
    %v1437 = vadd.f32 %v1361, %v1433
    %v1438 = vxor.u32 %v1437, 2147483648
    %v1439 = vmul.f32 %v1438, 1.442695
    %v1440 = vpow.pop %v1439
    %v1441 = vadd.f32 %v1440, 1.0
    %v1442 = vrcp.pop %v1441
    %v1443 = vmul.f32 1.0, %v1442
    %v1444 = vadd.f32 %v1435, %v983
    %v1445 = vmul.f32 %v1443, %v1444
    %v1446 = vadd.f32 %v1363, %v1445
    %v1447 = vtanh.pop %v1446
    %v1448 = vmul.f32 %v1365, %v1447
    %v1449 = vsub.f32 1.0, %v1365
    %v1450 = vmul.f32 %v1449, %v1359
    %v1451 = vadd.f32 %v1448, %v1450
    %s1452 = scalar_lea.vmem [#allocation2], 48
    %v1453 = vld [vmem:[%s1452] sm:$0xff]
    %s1454 = scalar_lea.vmem [#allocation3], 48
    %v1455 = vld [vmem:[%s1454] sm:$0xff]
    %s1456 = scalar_lea.vmem [#allocation4], 48
    %v1457 = vld [vmem:[%s1456] sm:$0xff]
    %1458 = vmatprep.subr.mxu0 %v868
    %1459 = vmatpush1.msra.mxu0 %v867
    %1460 = vmatprep.subr.mxu0 %v870
    %1461 = vmatpush1.msra.mxu0 %v869
    %1462 = vmatprep.subr.mxu0 %v872
    %1463 = vmatpush1.msra.mxu0 %v871
    %1464 = vmatprep.subr.mxu0 %v874
    %1465 = vmatpush1.msra.mxu0 %v873
    %1466 = vmatprep.subr.mxu0 %v876
    %1467 = vmatpush1.msra.mxu0 %v875
    %1468 = vmatprep.subr.mxu0 %v878
    %1469 = vmatpush1.msra.mxu0 %v877
    %1470 = vmatprep.subr.mxu0 %v880
    %1471 = vmatpush1.msra.mxu0 %v879
    %1472 = vmatprep.subr.mxu0 %v882
    %1473 = vmatpush1.msra.mxu0 %v881
    %1474 = vmatprep.subr.mxu0 %v884
    %1475 = vmatpush1.msra.mxu0 %v883
    %1476 = vmatprep.subr.mxu0 %v886
    %1477 = vmatpush1.msra.mxu0 %v885
    %1478 = vmatprep.subr.mxu0 %v888
    %1479 = vmatpush1.msra.mxu0 %v887
    %1480 = vmatprep.subr.mxu0 %v890
    %1481 = vmatpush1.msra.mxu0 %v889
    %1482 = vmatprep.subr.mxu0 %v892
    %1483 = vmatpush1.msra.mxu0 %v891
    %1484 = vmatprep.subr.mxu0 %v894
    %1485 = vmatpush1.msra.mxu0 %v893
    %1486 = vmatprep.subr.mxu0 %v896
    %1487 = vmatpush1.msra.mxu0 %v895
    %1488 = vmatprep.subr.mxu0 %v898
    %1489 = vmatpush1.msra.mxu0 %v897
    %1490 = vmatprep.subr.mxu0 0.0
    %1491 = vmatpush1.msra.mxu0 0.0
    %1492 = vmatprep.subr.mxu0 0.0
    %1493 = vmatpush1.msra.mxu0 0.0
    %1494 = vmatprep.subr.mxu0 0.0
    %1495 = vmatpush1.msra.mxu0 0.0
    %1496 = vmatprep.subr.mxu0 0.0
    %1497 = vmatpush1.msra.mxu0 0.0
    %1498 = vmatprep.subr.mxu0 0.0
    %1499 = vmatpush1.msra.mxu0 0.0
    %1500 = vmatprep.subr.mxu0 0.0
    %1501 = vmatpush1.msra.mxu0 0.0
    %1502 = vmatprep.subr.mxu0 0.0
    %1503 = vmatpush1.msra.mxu0 0.0
    %1504 = vmatprep.subr.mxu0 0.0
    %1505 = vmatpush1.msra.mxu0 0.0
    %1506 = vmatprep.subr.mxu0 0.0
    %1507 = vmatpush1.msra.mxu0 0.0
    %1508 = vmatprep.subr.mxu0 0.0
    %1509 = vmatpush1.msra.mxu0 0.0
    %1510 = vmatprep.subr.mxu0 0.0
    %1511 = vmatpush1.msra.mxu0 0.0
    %1512 = vmatprep.subr.mxu0 0.0
    %1513 = vmatpush1.msra.mxu0 0.0
    %1514 = vmatprep.subr.mxu0 0.0
    %1515 = vmatpush1.msra.mxu0 0.0
    %1516 = vmatprep.subr.mxu0 0.0
    %1517 = vmatpush1.msra.mxu0 0.0
    %1518 = vmatprep.subr.mxu0 0.0
    %1519 = vmatpush1.msra.mxu0 0.0
    %1520 = vmatprep.subr.mxu0 0.0
    %1521 = vmatpush1.msra.mxu0 0.0
    %1522 = vmatprep.mubr.f32.mxu0 0.0
    %1523 = vmatmul.mubr.f32.gmra.mrb[0].mxu0 %v1451
    %v1524 = vpop.f32.mrb[0].mxu0
    %v1525 = vadd.f32 0.0, %v1524
    %v1526 = vpop.f32.mrb[0].mxu0
    %v1527 = vadd.f32 0.0, %v1526
    %1528 = vdwg.mxu0
    %v1529 = vadd.f32 %v1453, %v1525
    %v1530 = vxor.u32 %v1529, 2147483648
    %v1531 = vmul.f32 %v1530, 1.442695
    %v1532 = vpow.pop %v1531
    %v1533 = vadd.f32 %v1532, 1.0
    %v1534 = vrcp.pop %v1533
    %v1535 = vmul.f32 1.0, %v1534
    %v1536 = vadd.f32 %v1527, %v983
    %v1537 = vmul.f32 %v1535, %v1536
    %v1538 = vadd.f32 %v1455, %v1537
    %v1539 = vtanh.pop %v1538
    %v1540 = vmul.f32 %v1457, %v1539
    %v1541 = vsub.f32 1.0, %v1457
    %v1542 = vmul.f32 %v1541, %v1451
    %v1543 = vadd.f32 %v1540, %v1542
    %s1544 = scalar_lea.vmem [#allocation2], 56
    %v1545 = vld [vmem:[%s1544] sm:$0xff]
    %s1546 = scalar_lea.vmem [#allocation3], 56
    %v1547 = vld [vmem:[%s1546] sm:$0xff]
    %s1548 = scalar_lea.vmem [#allocation4], 56
    %v1549 = vld [vmem:[%s1548] sm:$0xff]
    %1550 = vmatprep.subr.mxu0 %v868
    %1551 = vmatpush1.msra.mxu0 %v867
    %1552 = vmatprep.subr.mxu0 %v870
    %1553 = vmatpush1.msra.mxu0 %v869
    %1554 = vmatprep.subr.mxu0 %v872
    %1555 = vmatpush1.msra.mxu0 %v871
    %1556 = vmatprep.subr.mxu0 %v874
    %1557 = vmatpush1.msra.mxu0 %v873
    %1558 = vmatprep.subr.mxu0 %v876
    %1559 = vmatpush1.msra.mxu0 %v875
    %1560 = vmatprep.subr.mxu0 %v878
    %1561 = vmatpush1.msra.mxu0 %v877
    %1562 = vmatprep.subr.mxu0 %v880
    %1563 = vmatpush1.msra.mxu0 %v879
    %1564 = vmatprep.subr.mxu0 %v882
    %1565 = vmatpush1.msra.mxu0 %v881
    %1566 = vmatprep.subr.mxu0 %v884
    %1567 = vmatpush1.msra.mxu0 %v883
    %1568 = vmatprep.subr.mxu0 %v886
    %1569 = vmatpush1.msra.mxu0 %v885
    %1570 = vmatprep.subr.mxu0 %v888
    %1571 = vmatpush1.msra.mxu0 %v887
    %1572 = vmatprep.subr.mxu0 %v890
    %1573 = vmatpush1.msra.mxu0 %v889
    %1574 = vmatprep.subr.mxu0 %v892
    %1575 = vmatpush1.msra.mxu0 %v891
    %1576 = vmatprep.subr.mxu0 %v894
    %1577 = vmatpush1.msra.mxu0 %v893
    %1578 = vmatprep.subr.mxu0 %v896
    %1579 = vmatpush1.msra.mxu0 %v895
    %1580 = vmatprep.subr.mxu0 %v898
    %1581 = vmatpush1.msra.mxu0 %v897
    %1582 = vmatprep.subr.mxu0 0.0
    %1583 = vmatpush1.msra.mxu0 0.0
    %1584 = vmatprep.subr.mxu0 0.0
    %1585 = vmatpush1.msra.mxu0 0.0
    %1586 = vmatprep.subr.mxu0 0.0
    %1587 = vmatpush1.msra.mxu0 0.0
    %1588 = vmatprep.subr.mxu0 0.0
    %1589 = vmatpush1.msra.mxu0 0.0
    %1590 = vmatprep.subr.mxu0 0.0
    %1591 = vmatpush1.msra.mxu0 0.0
    %1592 = vmatprep.subr.mxu0 0.0
    %1593 = vmatpush1.msra.mxu0 0.0
    %1594 = vmatprep.subr.mxu0 0.0
    %1595 = vmatpush1.msra.mxu0 0.0
    %1596 = vmatprep.subr.mxu0 0.0
    %1597 = vmatpush1.msra.mxu0 0.0
    %1598 = vmatprep.subr.mxu0 0.0
    %1599 = vmatpush1.msra.mxu0 0.0
    %1600 = vmatprep.subr.mxu0 0.0
    %1601 = vmatpush1.msra.mxu0 0.0
    %1602 = vmatprep.subr.mxu0 0.0
    %1603 = vmatpush1.msra.mxu0 0.0
    %1604 = vmatprep.subr.mxu0 0.0
    %1605 = vmatpush1.msra.mxu0 0.0
    %1606 = vmatprep.subr.mxu0 0.0
    %1607 = vmatpush1.msra.mxu0 0.0
    %1608 = vmatprep.subr.mxu0 0.0
    %1609 = vmatpush1.msra.mxu0 0.0
    %1610 = vmatprep.subr.mxu0 0.0
    %1611 = vmatpush1.msra.mxu0 0.0
    %1612 = vmatprep.subr.mxu0 0.0
    %1613 = vmatpush1.msra.mxu0 0.0
    %1614 = vmatprep.mubr.f32.mxu0 0.0
    %1615 = vmatmul.mubr.f32.gmra.mrb[0].mxu0 %v1543
    %v1616 = vpop.f32.mrb[0].mxu0
    %v1617 = vadd.f32 0.0, %v1616
    %v1618 = vpop.f32.mrb[0].mxu0
    %v1619 = vadd.f32 0.0, %v1618
    %1620 = vdwg.mxu0
    %v1621 = vadd.f32 %v1545, %v1617
    %v1622 = vxor.u32 %v1621, 2147483648
    %v1623 = vmul.f32 %v1622, 1.442695
    %v1624 = vpow.pop %v1623
    %v1625 = vadd.f32 %v1624, 1.0
    %v1626 = vrcp.pop %v1625
    %v1627 = vmul.f32 1.0, %v1626
    %v1628 = vadd.f32 %v1619, %v983
    %v1629 = vmul.f32 %v1627, %v1628
    %v1630 = vadd.f32 %v1547, %v1629
    %v1631 = vtanh.pop %v1630
    %v1632 = vmul.f32 %v1549, %v1631
    %v1633 = vsub.f32 1.0, %v1549
    %v1634 = vmul.f32 %v1633, %v1543
    %v1635 = vadd.f32 %v1632, %v1634
    %v1636 = vld [vmem:[#allocation10 + $0x380] sm:$0xff]
    %v1637 = vld [vmem:[#allocation10 + $0x388] sm:$0xff]
    %v1638 = vld [vmem:[#allocation10 + $0x390] sm:$0xff]
    %v1639 = vld [vmem:[#allocation10 + $0x398] sm:$0xff]
    %v1640 = vld [vmem:[#allocation10 + $0x3a0] sm:$0xff]
    %v1641 = vld [vmem:[#allocation10 + $0x3a8] sm:$0xff]
    %v1642 = vld [vmem:[#allocation10 + $0x3b0] sm:$0xff]
    %v1643 = vld [vmem:[#allocation10 + $0x3b8] sm:$0xff]
    %v1644 = vld [vmem:[#allocation10 + $0x3c0] sm:$0xff]
    %v1645 = vld [vmem:[#allocation10 + $0x3c8] sm:$0xff]
    %v1646 = vld [vmem:[#allocation10 + $0x3d0] sm:$0xff]
    %v1647 = vld [vmem:[#allocation10 + $0x3d8] sm:$0xff]
    %v1648 = vld [vmem:[#allocation10 + $0x3e0] sm:$0xff]
    %v1649 = vld [vmem:[#allocation10 + $0x3e8] sm:$0xff]
    %v1650 = vld [vmem:[#allocation10 + $0x3f0] sm:$0xff]
    %v1651 = vld [vmem:[#allocation10 + $0x3f8] sm:$0xff]
    %v1652 = vld [vmem:[#allocation10 + $0x400] sm:$0xff]
    %v1653 = vld [vmem:[#allocation10 + $0x408] sm:$0xff]
    %v1654 = vld [vmem:[#allocation10 + $0x410] sm:$0xff]
    %v1655 = vld [vmem:[#allocation10 + $0x418] sm:$0xff]
    %v1656 = vld [vmem:[#allocation10 + $0x420] sm:$0xff]
    %v1657 = vld [vmem:[#allocation10 + $0x428] sm:$0xff]
    %v1658 = vld [vmem:[#allocation10 + $0x430] sm:$0xff]
    %v1659 = vld [vmem:[#allocation10 + $0x438] sm:$0xff]
    %v1660 = vld [vmem:[#allocation10 + $0x440] sm:$0xff]
    %v1661 = vld [vmem:[#allocation10 + $0x448] sm:$0xff]
    %v1662 = vld [vmem:[#allocation10 + $0x450] sm:$0xff]
    %v1663 = vld [vmem:[#allocation10 + $0x458] sm:$0xff]
    %v1664 = vld [vmem:[#allocation10 + $0x460] sm:$0xff]
    %v1665 = vld [vmem:[#allocation10 + $0x468] sm:$0xff]
    %v1666 = vld [vmem:[#allocation10 + $0x470] sm:$0xff]
    %v1667 = vld [vmem:[#allocation10 + $0x478] sm:$0xff]
    %1668 = vmatprep.subr.mxu0 0.0
    %1669 = vmatpush1.msra.mxu0 %v1652
    %1670 = vmatprep.subr.mxu0 0.0
    %1671 = vmatpush1.msra.mxu0 %v1653
    %1672 = vmatprep.subr.mxu0 0.0
    %1673 = vmatpush1.msra.mxu0 %v1654
    %1674 = vmatprep.subr.mxu0 0.0
    %1675 = vmatpush1.msra.mxu0 %v1655
    %1676 = vmatprep.subr.mxu0 0.0
    %1677 = vmatpush1.msra.mxu0 %v1656
    %1678 = vmatprep.subr.mxu0 0.0
    %1679 = vmatpush1.msra.mxu0 %v1657
    %1680 = vmatprep.subr.mxu0 0.0
    %1681 = vmatpush1.msra.mxu0 %v1658
    %1682 = vmatprep.subr.mxu0 0.0
    %1683 = vmatpush1.msra.mxu0 %v1659
    %1684 = vmatprep.subr.mxu0 0.0
    %1685 = vmatpush1.msra.mxu0 %v1660
    %1686 = vmatprep.subr.mxu0 0.0
    %1687 = vmatpush1.msra.mxu0 %v1661
    %1688 = vmatprep.subr.mxu0 0.0
    %1689 = vmatpush1.msra.mxu0 %v1662
    %1690 = vmatprep.subr.mxu0 0.0
    %1691 = vmatpush1.msra.mxu0 %v1663
    %1692 = vmatprep.subr.mxu0 0.0
    %1693 = vmatpush1.msra.mxu0 %v1664
    %1694 = vmatprep.subr.mxu0 0.0
    %1695 = vmatpush1.msra.mxu0 %v1665
    %1696 = vmatprep.subr.mxu0 0.0
    %1697 = vmatpush1.msra.mxu0 %v1666
    %1698 = vmatprep.subr.mxu0 0.0
    %1699 = vmatpush1.msra.mxu0 %v1667
    %1700 = vmatprep.subr.mxu0 0.0
    %1701 = vmatpush1.msra.mxu0 0.0
    %1702 = vmatprep.subr.mxu0 0.0
    %1703 = vmatpush1.msra.mxu0 0.0
    %1704 = vmatprep.subr.mxu0 0.0
    %1705 = vmatpush1.msra.mxu0 0.0
    %1706 = vmatprep.subr.mxu0 0.0
    %1707 = vmatpush1.msra.mxu0 0.0
    %1708 = vmatprep.subr.mxu0 0.0
    %1709 = vmatpush1.msra.mxu0 0.0
    %1710 = vmatprep.subr.mxu0 0.0
    %1711 = vmatpush1.msra.mxu0 0.0
    %1712 = vmatprep.subr.mxu0 0.0
    %1713 = vmatpush1.msra.mxu0 0.0
    %1714 = vmatprep.subr.mxu0 0.0
    %1715 = vmatpush1.msra.mxu0 0.0
    %1716 = vmatprep.subr.mxu0 0.0
    %1717 = vmatpush1.msra.mxu0 0.0
    %1718 = vmatprep.subr.mxu0 0.0
    %1719 = vmatpush1.msra.mxu0 0.0
    %1720 = vmatprep.subr.mxu0 0.0
    %1721 = vmatpush1.msra.mxu0 0.0
    %1722 = vmatprep.subr.mxu0 0.0
    %1723 = vmatpush1.msra.mxu0 0.0
    %1724 = vmatprep.subr.mxu0 0.0
    %1725 = vmatpush1.msra.mxu0 0.0
    %1726 = vmatprep.subr.mxu0 0.0
    %1727 = vmatpush1.msra.mxu0 0.0
    %1728 = vmatprep.subr.mxu0 0.0
    %1729 = vmatpush1.msra.mxu0 0.0
    %1730 = vmatprep.subr.mxu0 0.0
    %1731 = vmatpush1.msra.mxu0 0.0
    %1732 = vmatprep.mubr.f32.mxu0 0.0
    %1733 = vmatmul.mubr.f32.gmra.mrb[0].mxu0 %v1635
    %v1734 = vpop.f32.mrb[0].mxu0
    %v1735 = vadd.f32 0.0, %v1734
    %v1736 = vpop.f32.mrb[0].mxu0
    %1737 = vdwg.mxu0
    %1738 = vmatprep.subr.mxu0 0.0
    %1739 = vmatpush1.msra.mxu0 %v1636
    %1740 = vmatprep.subr.mxu0 0.0
    %1741 = vmatpush1.msra.mxu0 %v1637
    %1742 = vmatprep.subr.mxu0 0.0
    %1743 = vmatpush1.msra.mxu0 %v1638
    %1744 = vmatprep.subr.mxu0 0.0
    %1745 = vmatpush1.msra.mxu0 %v1639
    %1746 = vmatprep.subr.mxu0 0.0
    %1747 = vmatpush1.msra.mxu0 %v1640
    %1748 = vmatprep.subr.mxu0 0.0
    %1749 = vmatpush1.msra.mxu0 %v1641
    %1750 = vmatprep.subr.mxu0 0.0
    %1751 = vmatpush1.msra.mxu0 %v1642
    %1752 = vmatprep.subr.mxu0 0.0
    %1753 = vmatpush1.msra.mxu0 %v1643
    %1754 = vmatprep.subr.mxu0 0.0
    %1755 = vmatpush1.msra.mxu0 %v1644
    %1756 = vmatprep.subr.mxu0 0.0
    %1757 = vmatpush1.msra.mxu0 %v1645
    %1758 = vmatprep.subr.mxu0 0.0
    %1759 = vmatpush1.msra.mxu0 %v1646
    %1760 = vmatprep.subr.mxu0 0.0
    %1761 = vmatpush1.msra.mxu0 %v1647
    %1762 = vmatprep.subr.mxu0 0.0
    %1763 = vmatpush1.msra.mxu0 %v1648
    %1764 = vmatprep.subr.mxu0 0.0
    %1765 = vmatpush1.msra.mxu0 %v1649
    %1766 = vmatprep.subr.mxu0 0.0
    %1767 = vmatpush1.msra.mxu0 %v1650
    %1768 = vmatprep.subr.mxu0 0.0
    %1769 = vmatpush1.msra.mxu0 %v1651
    %1770 = vmatprep.subr.mxu0 0.0
    %1771 = vmatpush1.msra.mxu0 0.0
    %1772 = vmatprep.subr.mxu0 0.0
    %1773 = vmatpush1.msra.mxu0 0.0
    %1774 = vmatprep.subr.mxu0 0.0
    %1775 = vmatpush1.msra.mxu0 0.0
    %1776 = vmatprep.subr.mxu0 0.0
    %1777 = vmatpush1.msra.mxu0 0.0
    %1778 = vmatprep.subr.mxu0 0.0
    %1779 = vmatpush1.msra.mxu0 0.0
    %1780 = vmatprep.subr.mxu0 0.0
    %1781 = vmatpush1.msra.mxu0 0.0
    %1782 = vmatprep.subr.mxu0 0.0
    %1783 = vmatpush1.msra.mxu0 0.0
    %1784 = vmatprep.subr.mxu0 0.0
    %1785 = vmatpush1.msra.mxu0 0.0
    %1786 = vmatprep.subr.mxu0 0.0
    %1787 = vmatpush1.msra.mxu0 0.0
    %1788 = vmatprep.subr.mxu0 0.0
    %1789 = vmatpush1.msra.mxu0 0.0
    %1790 = vmatprep.subr.mxu0 0.0
    %1791 = vmatpush1.msra.mxu0 0.0
    %1792 = vmatprep.subr.mxu0 0.0
    %1793 = vmatpush1.msra.mxu0 0.0
    %1794 = vmatprep.subr.mxu0 0.0
    %1795 = vmatpush1.msra.mxu0 0.0
    %1796 = vmatprep.subr.mxu0 0.0
    %1797 = vmatpush1.msra.mxu0 0.0
    %1798 = vmatprep.subr.mxu0 0.0
    %1799 = vmatpush1.msra.mxu0 0.0
    %1800 = vmatprep.subr.mxu0 0.0
    %1801 = vmatpush1.msra.mxu0 0.0
    %1802 = vmatprep.mubr.f32.mxu0 0.0
    %1803 = vmatmul.mubr.f32.gmra.mrb[0].mxu0 %v85
    %v1804 = vpop.f32.mrb[0].mxu0
    %v1805 = vadd.f32 %v1735, %v1804
    %v1806 = vpop.f32.mrb[0].mxu0
    %1807 = vdwg.mxu0
    %v1808 = vld [vmem:[#allocation10 + $0x480] sm:$0xff]
    %v1809 = vld [vmem:[#allocation10 + $0x488] sm:$0xff]
    %v1810 = vld [vmem:[#allocation10 + $0x490] sm:$0xff]
    %v1811 = vld [vmem:[#allocation10 + $0x498] sm:$0xff]
    %v1812 = vld [vmem:[#allocation10 + $0x4a0] sm:$0xff]
    %v1813 = vld [vmem:[#allocation10 + $0x4a8] sm:$0xff]
    %v1814 = vld [vmem:[#allocation10 + $0x4b0] sm:$0xff]
    %v1815 = vld [vmem:[#allocation10 + $0x4b8] sm:$0xff]
    %v1816 = vld [vmem:[#allocation10 + $0x4c0] sm:$0xff]
    %v1817 = vld [vmem:[#allocation10 + $0x4c8] sm:$0xff]
    %v1818 = vld [vmem:[#allocation10 + $0x4d0] sm:$0xff]
    %v1819 = vld [vmem:[#allocation10 + $0x4d8] sm:$0xff]
    %v1820 = vld [vmem:[#allocation10 + $0x4e0] sm:$0xff]
    %v1821 = vld [vmem:[#allocation10 + $0x4e8] sm:$0xff]
    %v1822 = vld [vmem:[#allocation10 + $0x4f0] sm:$0xff]
    %v1823 = vld [vmem:[#allocation10 + $0x4f8] sm:$0xff]
    %1824 = vmatprep.subr.mxu0 0.0
    %1825 = vmatpush1.msra.mxu0 %v1808
    %1826 = vmatprep.subr.mxu0 0.0
    %1827 = vmatpush1.msra.mxu0 %v1809
    %1828 = vmatprep.subr.mxu0 0.0
    %1829 = vmatpush1.msra.mxu0 %v1810
    %1830 = vmatprep.subr.mxu0 0.0
    %1831 = vmatpush1.msra.mxu0 %v1811
    %1832 = vmatprep.subr.mxu0 0.0
    %1833 = vmatpush1.msra.mxu0 %v1812
    %1834 = vmatprep.subr.mxu0 0.0
    %1835 = vmatpush1.msra.mxu0 %v1813
    %1836 = vmatprep.subr.mxu0 0.0
    %1837 = vmatpush1.msra.mxu0 %v1814
    %1838 = vmatprep.subr.mxu0 0.0
    %1839 = vmatpush1.msra.mxu0 %v1815
    %1840 = vmatprep.subr.mxu0 0.0
    %1841 = vmatpush1.msra.mxu0 %v1816
    %1842 = vmatprep.subr.mxu0 0.0
    %1843 = vmatpush1.msra.mxu0 %v1817
    %1844 = vmatprep.subr.mxu0 0.0
    %1845 = vmatpush1.msra.mxu0 %v1818
    %1846 = vmatprep.subr.mxu0 0.0
    %1847 = vmatpush1.msra.mxu0 %v1819
    %1848 = vmatprep.subr.mxu0 0.0
    %1849 = vmatpush1.msra.mxu0 %v1820
    %1850 = vmatprep.subr.mxu0 0.0
    %1851 = vmatpush1.msra.mxu0 %v1821
    %1852 = vmatprep.subr.mxu0 0.0
    %1853 = vmatpush1.msra.mxu0 %v1822
    %1854 = vmatprep.subr.mxu0 0.0
    %1855 = vmatpush1.msra.mxu0 %v1823
    %1856 = vmatprep.subr.mxu0 0.0
    %1857 = vmatpush1.msra.mxu0 0.0
    %1858 = vmatprep.subr.mxu0 0.0
    %1859 = vmatpush1.msra.mxu0 0.0
    %1860 = vmatprep.subr.mxu0 0.0
    %1861 = vmatpush1.msra.mxu0 0.0
    %1862 = vmatprep.subr.mxu0 0.0
    %1863 = vmatpush1.msra.mxu0 0.0
    %1864 = vmatprep.subr.mxu0 0.0
    %1865 = vmatpush1.msra.mxu0 0.0
    %1866 = vmatprep.subr.mxu0 0.0
    %1867 = vmatpush1.msra.mxu0 0.0
    %1868 = vmatprep.subr.mxu0 0.0
    %1869 = vmatpush1.msra.mxu0 0.0
    %1870 = vmatprep.subr.mxu0 0.0
    %1871 = vmatpush1.msra.mxu0 0.0
    %1872 = vmatprep.subr.mxu0 0.0
    %1873 = vmatpush1.msra.mxu0 0.0
    %1874 = vmatprep.subr.mxu0 0.0
    %1875 = vmatpush1.msra.mxu0 0.0
    %1876 = vmatprep.subr.mxu0 0.0
    %1877 = vmatpush1.msra.mxu0 0.0
    %1878 = vmatprep.subr.mxu0 0.0
    %1879 = vmatpush1.msra.mxu0 0.0
    %1880 = vmatprep.subr.mxu0 0.0
    %1881 = vmatpush1.msra.mxu0 0.0
    %1882 = vmatprep.subr.mxu0 0.0
    %1883 = vmatpush1.msra.mxu0 0.0
    %1884 = vmatprep.subr.mxu0 0.0
    %1885 = vmatpush1.msra.mxu0 0.0
    %1886 = vmatprep.subr.mxu0 0.0
    %1887 = vmatpush1.msra.mxu0 0.0
    %1888 = vmatprep.mubr.f32.mxu0 0.0
    %1889 = vmatmul.mubr.f32.gmra.mrb[0].mxu0 %v84
    %v1890 = vpop.f32.mrb[0].mxu0
    %v1891 = vadd.f32 0.0, %v1890
    %v1892 = vpop.f32.mrb[0].mxu0
    %1893 = vdwg.mxu0
    %v1894 = vadd.f32 %v1805, %v1891
    %v1895 = vlaneseq
    %v1896 = vshrl.u32 %v1895, 7
    %v1897 = vsub.s32 5, %v1896
    %v1898 = vrot.slane %v86, %v1897
    %v1899 = vadd.f32 %v1894, %v1898
    %v1900 = vmax.f32 %v1899, 0.0
    %1901 = vst [vmem:[#allocation13] sm:$0xff] %v1900
    // Predicated region
    $region38: #{tpu_custom_call.1} parent=1 // pred_check
      _
    $region39: #{tpu_custom_call.1} parent=1 // pred_check_branch
      %1903 = sbr.rel (0) target = $region41
    $region40: #{tpu_custom_call.1} parent=1 // pred_region
      %s1905 = ssub.s32 128, 128
      %1906 = vsyncadd [#allocation7], %s1905
      %s1908 = sshll.u32 [#allocation13], 4
      %s1909 = int_to_ptr.vmem [resolvable:$true] %s1908
      %1911 = dma.vmem_to_hbm [thread:$0]  %s1909, 128, %s5, [#allocation7]
    $region41: #{tpu_custom_call.1} parent=1 // pred_fallthru
      _
    // Predicated region
    $region42: #{tpu_custom_call.1} parent=1 // pred_check
      _
    $region43: #{tpu_custom_call.1} parent=1 // pred_check_branch
      %1913 = sbr.rel (0) target = $region45
    $region44: #{tpu_custom_call.1} parent=1 // pred_region
      %1914 = dma.done [#allocation7], 128
    $region45: #{tpu_custom_call.1} parent=1 // pred_fallthru
      _
    %1915 = vsyncpa [#allocation6], 1
    %1916 = vsyncpa [#allocation9], 1
    %1917 = vsyncpa [#allocation12], 1
    %1918 = vsyncpa [#allocation7], 1

</llo_original>
